<compile_context>
chip_gen: v7x
topology: tpu7x:2x2x1
jax: 0.10.0
libtpu: 0.0.40
codegen_flags: <defaults>
</compile_context>

<pallas_src>
import functools

import jax
import jax.numpy as jnp
from jax.experimental import pallas as pl
from jax.experimental.pallas import tpu as pltpu


def _round_up(x, m):
    return (x + m - 1) // m * m


def _choose_chunk(T, cap):
    """Largest chunk length <= cap that divides T (worst case 1)."""
    if T <= cap:
        return T
    for tc in range(cap, 0, -1):
        if T % tc == 0:
            return tc
    return T


# --------------------------------------------------------------------------
# Kernel
# --------------------------------------------------------------------------
def _cross_encoder_kernel(x_ref, wih1_ref, wrec_ref, bias_ref, out_ref,
                          xproj_scr, hc_scr, cc_scr,
                          *, chunk_len, h1p, h2p, unroll):
    Bt = out_ref.shape[0]
    HH = h1p + h2p            # concatenated [h1 | h2] state width
    c_idx = pl.program_id(1)  # T-chunk index (reduction-like axis, "arbitrary")

    # ---- Phase 1 (off the serial path): this chunk's layer-1 input projection.
    # wih1 is packed gate-major with zero layer-2 columns; bias carries b1 in
    # the layer-1 columns and b2 in the layer-2 columns, so the loop body needs
    # only ONE full-width add on top of the fused recurrent matmul.
    xproj_scr[...] = (
        jnp.dot(x_ref[...], wih1_ref[...], preferred_element_type=jnp.float32)
        + bias_ref[...])

    @pl.when(c_idx == 0)
    def _():
        hc_scr[...] = jnp.zeros_like(hc_scr)
        cc_scr[...] = jnp.zeros_like(cc_scr)
        # Layer 2 runs one (skewed) step behind layer 1, so the very first
        # skewed iteration has no layer-2 timestep.  Zero its layer-2 gate
        # pre-activations: i=f=o=0.5, g=0  ->  (h2, c2) stay exactly 0.
        for k in range(4):
            xproj_scr[0:Bt, k * HH + h1p:(k + 1) * HH] = (
                jnp.zeros((Bt, h2p), jnp.float32))

    wrec = wrec_ref[...]        # loop-invariant fused recurrent weight

    def fused_cell(g, cc):
        # Full-width activations: 2 EUP pushes cover all 8 gates of both layers.
        sg = jax.nn.sigmoid(g)
        th = jnp.tanh(g)
        i = sg[:, 0:HH]
        f = sg[:, HH:2 * HH]
        gg = th[:, 2 * HH:3 * HH]
        o = sg[:, 3 * HH:4 * HH]
        c_new = f * cc + i * gg
        h_new = o * jnp.tanh(c_new)
        return h_new, c_new

    def step(t, carry):
        hc, cc = carry
        row = pl.multiple_of(t * Bt, 8)          # sublane-aligned dynamic slice
        # ONE fused recurrent matmul per step:
        #   [h1 | h2] @ [[whh1, wih2], [0, whh2]]   (gate-major columns)
        g = (jnp.dot(hc, wrec, preferred_element_type=jnp.float32)
             + xproj_scr[pl.ds(row, Bt), :])
        return fused_cell(g, cc)

    hc_f, cc_f = jax.lax.fori_loop(
        0, chunk_len, step, (hc_scr[...], cc_scr[...]), unroll=unroll)
    hc_scr[...] = hc_f
    cc_scr[...] = cc_f

    # ---- Drain iteration: layer-2 cell for the final timestep (the layer-1
    # half of this step is a dead value).  Only the last chunk writes out.
    @pl.when(c_idx == pl.num_programs(1) - 1)
    def _():
        g = (jnp.dot(hc_f, wrec, preferred_element_type=jnp.float32)
             + bias_ref[...])
        h_new, _ = fused_cell(g, cc_f)
        out_ref[...] = h_new[:, h1p:]


# --------------------------------------------------------------------------
# Host-side packing + wrapper
# --------------------------------------------------------------------------
def _pack_params(p1, p2, n_features, h1p, h2p):
    """Pack both LSTM layers into the fused, gate-major layout.

    Columns: [ i | f | g | o ], each block of width HH = h1p + h2p laid out as
    [layer-1 units | layer-2 units].
      wih1 : (F,  4*HH)  x_t contribution (layer-2 columns are zero)
      wrec : (HH, 4*HH)  [[whh1, wih2], [0, whh2]] fused recurrence
      bias : (1,  4*HH)  [b1 | b2] per gate block
    Zero padding is exact: padded gate columns have zero weights/bias, so the
    padded hidden units stay 0 forever and padded rows of wrec are zero.
    """
    F = n_features
    H1 = p1["w_hh"].shape[0]
    H2 = p2["w_hh"].shape[0]
    HH = h1p + h2p
    wih1 = jnp.zeros((F, 4 * HH), jnp.float32)
    wrec = jnp.zeros((HH, 4 * HH), jnp.float32)
    bias = jnp.zeros((1, 4 * HH), jnp.float32)
    for k in range(4):                                # PyTorch gate order i,f,g,o
        c1 = slice(k * HH, k * HH + H1)               # layer-1 columns of gate k
        c2 = slice(k * HH + h1p, k * HH + h1p + H2)   # layer-2 columns of gate k
        wih1 = wih1.at[:, c1].set(p1["w_ih"][:, k * H1:(k + 1) * H1])
        wrec = wrec.at[:H1, c1].set(p1["w_hh"][:, k * H1:(k + 1) * H1])
        wrec = wrec.at[:H1, c2].set(p2["w_ih"][:, k * H2:(k + 1) * H2])
        wrec = wrec.at[h1p:h1p + H2, c2].set(p2["w_hh"][:, k * H2:(k + 1) * H2])
        bias = bias.at[:, c1].set(p1["b"][:, k * H1:(k + 1) * H1])
        bias = bias.at[:, c2].set(p2["b"][:, k * H2:(k + 1) * H2])
    return wih1, wrec, bias


@functools.partial(jax.jit, static_argnames=("t_chunk_cap", "batch_tile"))
def _cross_encoder_forward_impl(x, p1, p2, t_chunk_cap, batch_tile):
    B, T, F = x.shape
    H1 = p1["w_hh"].shape[0]          # hidden_dim = 2 * embedding_dim
    H2 = p2["w_hh"].shape[0]          # embedding_dim

    # Batch tiling: default is a single tile (no extra serial passes on
    # 1-TC chips). On v7x pass batch_tile=Bp//2 to use the second TensorCore.
    Bt = _round_up(B, 8) if batch_tile is None else _round_up(batch_tile, 8)
    Bp = _round_up(B, Bt)
    nb = Bp // Bt

    # Pad hidden sizes so every gate block is a multiple of 32 lanes and the
    # fused gate width 4*(H1p+H2p) is a multiple of 128 lanes (lane dense).
    H1p = _round_up(H1, 32)
    H2p = _round_up(H2, 32)
    HH = H1p + H2p

    Tc = _choose_chunk(T, t_chunk_cap)
    nc = T // Tc

    wih1, wrec, bias = _pack_params(p1, p2, F, H1p, H2p)

    # time-major, batch padded + tiled:  (nb, T*Bt, F)
    x_tm = jnp.transpose(x, (1, 0, 2))                      # (T, B, F)
    x_tm = jnp.pad(x_tm, ((0, 0), (0, Bp - B), (0, 0)))     # (T, Bp, F)
    x_tiles = (x_tm.reshape(T, nb, Bt, F)
               .transpose(1, 0, 2, 3)
               .reshape(nb, T * Bt, F))

    kernel = functools.partial(_cross_encoder_kernel, chunk_len=Tc,
                               h1p=H1p, h2p=H2p, unroll=min(Tc, 8))

    out = pl.pallas_call(
        kernel,
        out_shape=jax.ShapeDtypeStruct((nb, Bt, H2p), jnp.float32),
        grid=(nb, nc),
        in_specs=[
            pl.BlockSpec((None, Tc * Bt, F), lambda b, c: (b, c, 0)),   # x chunk
            pl.BlockSpec((F, 4 * HH), lambda b, c: (0, 0)),             # wih1
            pl.BlockSpec((HH, 4 * HH), lambda b, c: (0, 0)),            # wrec
            pl.BlockSpec((1, 4 * HH), lambda b, c: (0, 0)),             # bias
        ],
        out_specs=pl.BlockSpec((None, Bt, H2p), lambda b, c: (b, 0, 0)),
        scratch_shapes=[
            pltpu.VMEM((Tc * Bt, 4 * HH), jnp.float32),   # per-chunk x-projection
            pltpu.VMEM((Bt, HH), jnp.float32),            # [h1 | h2] carry
            pltpu.VMEM((Bt, HH), jnp.float32),            # [c1 | c2] carry
        ],
        compiler_params=pltpu.CompilerParams(
            dimension_semantics=("parallel", "arbitrary")),
    )(x_tiles, wih1, wrec, bias)

    out = out.reshape(nb * Bt, H2p)[:B, :H2]
    return out[None]                                        # (1, B, embedding_dim)


def cross_encoder_forward(x, p1, p2, t_chunk_cap=64, batch_tile=None):
    """x: (B, T, n_features), batch_first.  Returns (1, B, embedding_dim)."""
    return _cross_encoder_forward_impl(x, p1, p2, t_chunk_cap=t_chunk_cap,
                                       batch_tile=batch_tile)


def init_lstm_params(key, in_dim, hidden_dim):
    """PyTorch-style U(-1/sqrt(H), 1/sqrt(H)) init, gate-fused layout (in,4H)/(H,4H)."""
    k = 1.0 / jnp.sqrt(jnp.float32(hidden_dim))
    k1, k2, k3, k4 = jax.random.split(key, 4)
    w_ih = jax.random.uniform(k1, (in_dim, 4 * hidden_dim), jnp.float32, -k, k)
    w_hh = jax.random.uniform(k2, (hidden_dim, 4 * hidden_dim), jnp.float32, -k, k)
    b_ih = jax.random.uniform(k3, (1, 4 * hidden_dim), jnp.float32, -k, k)
    b_hh = jax.random.uniform(k4, (1, 4 * hidden_dim), jnp.float32, -k, k)
    return {"w_ih": w_ih, "w_hh": w_hh, "b": b_ih + b_hh}


# ----- pure-JAX reference (lax.scan) for correctness check -----
def _lstm_ref(x_tm, w_ih, w_hh, b):
    H = w_hh.shape[0]

    def step(carry, x_t):
        h, c = carry
        g = x_t @ w_ih + h @ w_hh + b
        i = jax.nn.sigmoid(g[:, 0 * H:1 * H])
        f = jax.nn.sigmoid(g[:, 1 * H:2 * H])
        gg = jnp.tanh(g[:, 2 * H:3 * H])
        o = jax.nn.sigmoid(g[:, 3 * H:4 * H])
        c = f * c + i * gg
        h = o * jnp.tanh(c)
        return (h, c), h

    B = x_tm.shape[1]
    z = jnp.zeros((B, H), jnp.float32)
    _, ys = jax.lax.scan(step, (z, z), x_tm)
    return ys


def cross_encoder_ref(x, p1, p2):
    x_tm = jnp.transpose(x, (1, 0, 2))
    h1 = _lstm_ref(x_tm, p1["w_ih"], p1["w_hh"], p1["b"])
    h2 = _lstm_ref(h1, p2["w_ih"], p2["w_hh"], p2["b"])
    return h2[-1][None]


if __name__ == "__main__":
    # Small shapes consistent with the module's forward.
    B, T, F, E = 2, 8, 4, 16          # batch, seq_len, n_features, embedding_dim
    H1 = 2 * E                        # hidden_dim of rnn1

    key = jax.random.PRNGKey(0)
    kx, kxb, kp1, kp2 = jax.random.split(key, 4)
    x = jax.random.normal(kx, (B, T, F), dtype=jnp.float32)

    p1 = init_lstm_params(kp1, F, H1)   # rnn1: F  -> 2E
    p2 = init_lstm_params(kp2, H1, E)   # rnn2: 2E -> E

    # --- primary run (single T-chunk, single batch tile) ---
    out = jax.block_until_ready(cross_encoder_forward(x, p1, p2))
    assert out.shape == (1, B, E), out.shape
    ref = jax.block_until_ready(cross_encoder_ref(x, p1, p2))
    assert jnp.allclose(out, ref, rtol=1e-3, atol=1e-3), (
        float(jnp.max(jnp.abs(out - ref))))

    # --- exercise the T-chunked path (grid over T, state carried in scratch) ---
    out_c = jax.block_until_ready(cross_encoder_forward(x, p1, p2, t_chunk_cap=4))
    assert jnp.allclose(out_c, ref, rtol=1e-3, atol=1e-3), (
        float(jnp.max(jnp.abs(out_c - ref))))

    # --- exercise the batch-tile ("parallel") axis used for v7x megacore ---
    xb = jax.random.normal(kxb, (16, T, F), dtype=jnp.float32)
    out_b = jax.block_until_ready(cross_encoder_forward(xb, p1, p2, batch_tile=8))
    ref_b = jax.block_until_ready(cross_encoder_ref(xb, p1, p2))
    assert jnp.allclose(out_b, ref_b, rtol=1e-3, atol=1e-3), (
        float(jnp.max(jnp.abs(out_b - ref_b))))

    print("KERNEL_OK")
</pallas_src>

<mosaic_0001>
module attributes {stable_mosaic.version = 11 : i64} {
  func.func @_cross_encoder_kernel(%arg0: i32, %arg1: i32, %arg2: memref<1x64x4xf32, #tpu.memory_space<vmem>>, %arg3: memref<4x256xf32, #tpu.memory_space<vmem>>, %arg4: memref<64x256xf32, #tpu.memory_space<vmem>>, %arg5: memref<1x256xf32, #tpu.memory_space<vmem>>, %arg6: memref<1x8x32xf32, #tpu.memory_space<vmem>>, %arg7: memref<64x256xf32, #tpu.memory_space<vmem>>, %arg8: memref<8x64xf32, #tpu.memory_space<vmem>>, %arg9: memref<8x64xf32, #tpu.memory_space<vmem>>) attributes {dimension_semantics = [#tpu.dimension_semantics<parallel>, #tpu.dimension_semantics<arbitrary>], iteration_bounds = array<i64: 1, 1>, scalar_prefetch = 0 : i64, scratch_operands = 3 : i64, tpu.core_type = #tpu.core_type<tc>, window_params = [{transform_indices = @transform_0, window_bounds = array<i64: 1, 64, 4>}, {pipeline_mode = #tpu.pipeline_mode<synchronous>, transform_indices = @transform_1, window_bounds = array<i64: 4, 256>}, {pipeline_mode = #tpu.pipeline_mode<synchronous>, transform_indices = @transform_2, window_bounds = array<i64: 64, 256>}, {pipeline_mode = #tpu.pipeline_mode<synchronous>, transform_indices = @transform_3, window_bounds = array<i64: 1, 256>}, {transform_indices = @transform_4, window_bounds = array<i64: 1, 8, 32>}]} {
    %c0 = arith.constant 0 : index
    %c0_0 = arith.constant 0 : index
    %c0_1 = arith.constant 0 : index
    %0 = vector.load %arg2[%c0, %c0_0, %c0_1] : memref<1x64x4xf32, #tpu.memory_space<vmem>>, vector<1x64x4xf32>
    %1 = vector.shape_cast %0 : vector<1x64x4xf32> to vector<64x4xf32>
    %c0_2 = arith.constant 0 : index
    %c0_3 = arith.constant 0 : index
    %2 = vector.load %arg3[%c0_2, %c0_3] : memref<4x256xf32, #tpu.memory_space<vmem>>, vector<4x256xf32>
    %cst = arith.constant dense<0.000000e+00> : vector<64x256xf32>
    %3 = tpu.matmul %1, %2, %cst {dimension_numbers = #tpu.dot_dimension_numbers<[1], [0], [0], [1], [0, 0, 1, 1], [], []>} : vector<64x4xf32>, vector<4x256xf32>, vector<64x256xf32> -> vector<64x256xf32>
    %c0_4 = arith.constant 0 : index
    %c0_5 = arith.constant 0 : index
    %4 = vector.load %arg5[%c0_4, %c0_5] : memref<1x256xf32, #tpu.memory_space<vmem>>, vector<1x256xf32>
    %5 = vector.broadcast %4 : vector<1x256xf32> to vector<64x256xf32>
    %6 = arith.addf %3, %5 : vector<64x256xf32>
    %c0_6 = arith.constant 0 : index
    %c0_7 = arith.constant 0 : index
    %7 = vector.load %arg7[%c0_6, %c0_7] : memref<64x256xf32, #tpu.memory_space<vmem>>, vector<64x256xf32>
    tpu.vector_store %arg7[%c0_6, %c0_7], %6 {strides = array<i32>} : memref<64x256xf32, #tpu.memory_space<vmem>>, vector<64x256xf32>,
    %c0_i32 = arith.constant 0 : i32
    %8 = arith.cmpi eq, %arg1, %c0_i32 : i32
    %9 = arith.extui %8 : i1 to i32
    %c0_i32_8 = arith.constant 0 : i32
    %10 = arith.cmpi ne, %9, %c0_i32_8 : i32
    scf.if %10 {
      %cst_54 = arith.constant 0.000000e+00 : f32
      %187 = vector.broadcast %cst_54 : f32 to vector<8x64xf32>
      %c0_55 = arith.constant 0 : index
      %c0_56 = arith.constant 0 : index
      %188 = vector.load %arg8[%c0_55, %c0_56] : memref<8x64xf32, #tpu.memory_space<vmem>>, vector<8x64xf32>
      tpu.vector_store %arg8[%c0_55, %c0_56], %187 {strides = array<i32>} : memref<8x64xf32, #tpu.memory_space<vmem>>, vector<8x64xf32>,
      %cst_57 = arith.constant 0.000000e+00 : f32
      %189 = vector.broadcast %cst_57 : f32 to vector<8x64xf32>
      %c0_58 = arith.constant 0 : index
      %c0_59 = arith.constant 0 : index
      %190 = vector.load %arg9[%c0_58, %c0_59] : memref<8x64xf32, #tpu.memory_space<vmem>>, vector<8x64xf32>
      tpu.vector_store %arg9[%c0_58, %c0_59], %189 {strides = array<i32>} : memref<8x64xf32, #tpu.memory_space<vmem>>, vector<8x64xf32>,
      %cst_60 = arith.constant 0.000000e+00 : f32
      %191 = vector.broadcast %cst_60 : f32 to vector<8x32xf32>
      %c0_61 = arith.constant 0 : index
      %c32 = arith.constant 32 : index
      %192 = vector.load %arg7[%c0_61, %c32] : memref<64x256xf32, #tpu.memory_space<vmem>>, vector<8x32xf32>
      tpu.vector_store %arg7[%c0_61, %c32], %191 {strides = array<i32>} : memref<64x256xf32, #tpu.memory_space<vmem>>, vector<8x32xf32>,
      %cst_62 = arith.constant 0.000000e+00 : f32
      %193 = vector.broadcast %cst_62 : f32 to vector<8x32xf32>
      %c0_63 = arith.constant 0 : index
      %c96 = arith.constant 96 : index
      %194 = vector.load %arg7[%c0_63, %c96] : memref<64x256xf32, #tpu.memory_space<vmem>>, vector<8x32xf32>
      tpu.vector_store %arg7[%c0_63, %c96], %193 {strides = array<i32>} : memref<64x256xf32, #tpu.memory_space<vmem>>, vector<8x32xf32>,
      %cst_64 = arith.constant 0.000000e+00 : f32
      %195 = vector.broadcast %cst_64 : f32 to vector<8x32xf32>
      %c0_65 = arith.constant 0 : index
      %c160 = arith.constant 160 : index
      %196 = vector.load %arg7[%c0_65, %c160] : memref<64x256xf32, #tpu.memory_space<vmem>>, vector<8x32xf32>
      tpu.vector_store %arg7[%c0_65, %c160], %195 {strides = array<i32>} : memref<64x256xf32, #tpu.memory_space<vmem>>, vector<8x32xf32>,
      %cst_66 = arith.constant 0.000000e+00 : f32
      %197 = vector.broadcast %cst_66 : f32 to vector<8x32xf32>
      %c0_67 = arith.constant 0 : index
      %c224 = arith.constant 224 : index
      %198 = vector.load %arg7[%c0_67, %c224] : memref<64x256xf32, #tpu.memory_space<vmem>>, vector<8x32xf32>
      tpu.vector_store %arg7[%c0_67, %c224], %197 {strides = array<i32>} : memref<64x256xf32, #tpu.memory_space<vmem>>, vector<8x32xf32>,
    } else {
    }
    %c0_9 = arith.constant 0 : index
    %c0_10 = arith.constant 0 : index
    %11 = vector.load %arg4[%c0_9, %c0_10] : memref<64x256xf32, #tpu.memory_space<vmem>>, vector<64x256xf32>
    %c0_11 = arith.constant 0 : index
    %c0_12 = arith.constant 0 : index
    %12 = vector.load %arg8[%c0_11, %c0_12] : memref<8x64xf32, #tpu.memory_space<vmem>>, vector<8x64xf32>
    %c0_13 = arith.constant 0 : index
    %c0_14 = arith.constant 0 : index
    %13 = vector.load %arg9[%c0_13, %c0_14] : memref<8x64xf32, #tpu.memory_space<vmem>>, vector<8x64xf32>
    %c0_i32_15 = arith.constant 0 : i32
    %c8_i32 = arith.constant 8 : i32
    %14 = arith.muli %c0_i32_15, %c8_i32 : i32
    %15 = tpu.assume_multiple %14, 8 : i32
    %cst_16 = arith.constant dense<0.000000e+00> : vector<8x256xf32>
    %16 = tpu.matmul %12, %11, %cst_16 {dimension_numbers = #tpu.dot_dimension_numbers<[1], [0], [0], [1], [0, 0, 1, 1], [], []>} : vector<8x64xf32>, vector<64x256xf32>, vector<8x256xf32> -> vector<8x256xf32>
    %17 = arith.index_cast %15 : i32 to index
    %c0_17 = arith.constant 0 : index
    %18 = vector.load %arg7[%17, %c0_17] : memref<64x256xf32, #tpu.memory_space<vmem>>, vector<8x256xf32>
    %19 = arith.addf %16, %18 : vector<8x256xf32>
    %20 = arith.negf %19 : vector<8x256xf32>
    %21 = math.exp %20 : vector<8x256xf32>
    %cst_18 = arith.constant 1.000000e+00 : f32
    %22 = vector.broadcast %cst_18 : f32 to vector<8x256xf32>
    %23 = arith.addf %22, %21 : vector<8x256xf32>
    %24 = arith.divf %22, %23 : vector<8x256xf32>
    %25 = math.tanh %19 : vector<8x256xf32>
    %26 = vector.extract_strided_slice %24 {offsets = [0, 0], sizes = [8, 64], strides = [1, 1]} : vector<8x256xf32> to vector<8x64xf32>
    %27 = vector.extract_strided_slice %24 {offsets = [0, 64], sizes = [8, 64], strides = [1, 1]} : vector<8x256xf32> to vector<8x64xf32>
    %28 = vector.extract_strided_slice %25 {offsets = [0, 128], sizes = [8, 64], strides = [1, 1]} : vector<8x256xf32> to vector<8x64xf32>
    %29 = vector.extract_strided_slice %24 {offsets = [0, 192], sizes = [8, 64], strides = [1, 1]} : vector<8x256xf32> to vector<8x64xf32>
    %30 = arith.mulf %27, %13 : vector<8x64xf32>
    %31 = arith.mulf %26, %28 : vector<8x64xf32>
    %32 = arith.addf %30, %31 : vector<8x64xf32>
    %33 = math.tanh %32 : vector<8x64xf32>
    %34 = arith.mulf %29, %33 : vector<8x64xf32>
    %c1_i32 = arith.constant 1 : i32
    %c8_i32_19 = arith.constant 8 : i32
    %35 = arith.muli %c1_i32, %c8_i32_19 : i32
    %36 = tpu.assume_multiple %35, 8 : i32
    %cst_20 = arith.constant dense<0.000000e+00> : vector<8x256xf32>
    %37 = tpu.matmul %34, %11, %cst_20 {dimension_numbers = #tpu.dot_dimension_numbers<[1], [0], [0], [1], [0, 0, 1, 1], [], []>} : vector<8x64xf32>, vector<64x256xf32>, vector<8x256xf32> -> vector<8x256xf32>
    %38 = arith.index_cast %36 : i32 to index
    %c0_21 = arith.constant 0 : index
    %39 = vector.load %arg7[%38, %c0_21] : memref<64x256xf32, #tpu.memory_space<vmem>>, vector<8x256xf32>
    %40 = arith.addf %37, %39 : vector<8x256xf32>
    %41 = arith.negf %40 : vector<8x256xf32>
    %42 = math.exp %41 : vector<8x256xf32>
    %cst_22 = arith.constant 1.000000e+00 : f32
    %43 = vector.broadcast %cst_22 : f32 to vector<8x256xf32>
    %44 = arith.addf %43, %42 : vector<8x256xf32>
    %45 = arith.divf %43, %44 : vector<8x256xf32>
    %46 = math.tanh %40 : vector<8x256xf32>
    %47 = vector.extract_strided_slice %45 {offsets = [0, 0], sizes = [8, 64], strides = [1, 1]} : vector<8x256xf32> to vector<8x64xf32>
    %48 = vector.extract_strided_slice %45 {offsets = [0, 64], sizes = [8, 64], strides = [1, 1]} : vector<8x256xf32> to vector<8x64xf32>
    %49 = vector.extract_strided_slice %46 {offsets = [0, 128], sizes = [8, 64], strides = [1, 1]} : vector<8x256xf32> to vector<8x64xf32>
    %50 = vector.extract_strided_slice %45 {offsets = [0, 192], sizes = [8, 64], strides = [1, 1]} : vector<8x256xf32> to vector<8x64xf32>
    %51 = arith.mulf %48, %32 : vector<8x64xf32>
    %52 = arith.mulf %47, %49 : vector<8x64xf32>
    %53 = arith.addf %51, %52 : vector<8x64xf32>
    %54 = math.tanh %53 : vector<8x64xf32>
    %55 = arith.mulf %50, %54 : vector<8x64xf32>
    %c2_i32 = arith.constant 2 : i32
    %c8_i32_23 = arith.constant 8 : i32
    %56 = arith.muli %c2_i32, %c8_i32_23 : i32
    %57 = tpu.assume_multiple %56, 8 : i32
    %cst_24 = arith.constant dense<0.000000e+00> : vector<8x256xf32>
    %58 = tpu.matmul %55, %11, %cst_24 {dimension_numbers = #tpu.dot_dimension_numbers<[1], [0], [0], [1], [0, 0, 1, 1], [], []>} : vector<8x64xf32>, vector<64x256xf32>, vector<8x256xf32> -> vector<8x256xf32>
    %59 = arith.index_cast %57 : i32 to index
    %c0_25 = arith.constant 0 : index
    %60 = vector.load %arg7[%59, %c0_25] : memref<64x256xf32, #tpu.memory_space<vmem>>, vector<8x256xf32>
    %61 = arith.addf %58, %60 : vector<8x256xf32>
    %62 = arith.negf %61 : vector<8x256xf32>
    %63 = math.exp %62 : vector<8x256xf32>
    %cst_26 = arith.constant 1.000000e+00 : f32
    %64 = vector.broadcast %cst_26 : f32 to vector<8x256xf32>
    %65 = arith.addf %64, %63 : vector<8x256xf32>
    %66 = arith.divf %64, %65 : vector<8x256xf32>
    %67 = math.tanh %61 : vector<8x256xf32>
    %68 = vector.extract_strided_slice %66 {offsets = [0, 0], sizes = [8, 64], strides = [1, 1]} : vector<8x256xf32> to vector<8x64xf32>
    %69 = vector.extract_strided_slice %66 {offsets = [0, 64], sizes = [8, 64], strides = [1, 1]} : vector<8x256xf32> to vector<8x64xf32>
    %70 = vector.extract_strided_slice %67 {offsets = [0, 128], sizes = [8, 64], strides = [1, 1]} : vector<8x256xf32> to vector<8x64xf32>
    %71 = vector.extract_strided_slice %66 {offsets = [0, 192], sizes = [8, 64], strides = [1, 1]} : vector<8x256xf32> to vector<8x64xf32>
    %72 = arith.mulf %69, %53 : vector<8x64xf32>
    %73 = arith.mulf %68, %70 : vector<8x64xf32>
    %74 = arith.addf %72, %73 : vector<8x64xf32>
    %75 = math.tanh %74 : vector<8x64xf32>
    %76 = arith.mulf %71, %75 : vector<8x64xf32>
    %c3_i32 = arith.constant 3 : i32
    %c8_i32_27 = arith.constant 8 : i32
    %77 = arith.muli %c3_i32, %c8_i32_27 : i32
    %78 = tpu.assume_multiple %77, 8 : i32
    %cst_28 = arith.constant dense<0.000000e+00> : vector<8x256xf32>
    %79 = tpu.matmul %76, %11, %cst_28 {dimension_numbers = #tpu.dot_dimension_numbers<[1], [0], [0], [1], [0, 0, 1, 1], [], []>} : vector<8x64xf32>, vector<64x256xf32>, vector<8x256xf32> -> vector<8x256xf32>
    %80 = arith.index_cast %78 : i32 to index
    %c0_29 = arith.constant 0 : index
    %81 = vector.load %arg7[%80, %c0_29] : memref<64x256xf32, #tpu.memory_space<vmem>>, vector<8x256xf32>
    %82 = arith.addf %79, %81 : vector<8x256xf32>
    %83 = arith.negf %82 : vector<8x256xf32>
    %84 = math.exp %83 : vector<8x256xf32>
    %cst_30 = arith.constant 1.000000e+00 : f32
    %85 = vector.broadcast %cst_30 : f32 to vector<8x256xf32>
    %86 = arith.addf %85, %84 : vector<8x256xf32>
    %87 = arith.divf %85, %86 : vector<8x256xf32>
    %88 = math.tanh %82 : vector<8x256xf32>
    %89 = vector.extract_strided_slice %87 {offsets = [0, 0], sizes = [8, 64], strides = [1, 1]} : vector<8x256xf32> to vector<8x64xf32>
    %90 = vector.extract_strided_slice %87 {offsets = [0, 64], sizes = [8, 64], strides = [1, 1]} : vector<8x256xf32> to vector<8x64xf32>
    %91 = vector.extract_strided_slice %88 {offsets = [0, 128], sizes = [8, 64], strides = [1, 1]} : vector<8x256xf32> to vector<8x64xf32>
    %92 = vector.extract_strided_slice %87 {offsets = [0, 192], sizes = [8, 64], strides = [1, 1]} : vector<8x256xf32> to vector<8x64xf32>
    %93 = arith.mulf %90, %74 : vector<8x64xf32>
    %94 = arith.mulf %89, %91 : vector<8x64xf32>
    %95 = arith.addf %93, %94 : vector<8x64xf32>
    %96 = math.tanh %95 : vector<8x64xf32>
    %97 = arith.mulf %92, %96 : vector<8x64xf32>
    %c4_i32 = arith.constant 4 : i32
    %c8_i32_31 = arith.constant 8 : i32
    %98 = arith.muli %c4_i32, %c8_i32_31 : i32
    %99 = tpu.assume_multiple %98, 8 : i32
    %cst_32 = arith.constant dense<0.000000e+00> : vector<8x256xf32>
    %100 = tpu.matmul %97, %11, %cst_32 {dimension_numbers = #tpu.dot_dimension_numbers<[1], [0], [0], [1], [0, 0, 1, 1], [], []>} : vector<8x64xf32>, vector<64x256xf32>, vector<8x256xf32> -> vector<8x256xf32>
    %101 = arith.index_cast %99 : i32 to index
    %c0_33 = arith.constant 0 : index
    %102 = vector.load %arg7[%101, %c0_33] : memref<64x256xf32, #tpu.memory_space<vmem>>, vector<8x256xf32>
    %103 = arith.addf %100, %102 : vector<8x256xf32>
    %104 = arith.negf %103 : vector<8x256xf32>
    %105 = math.exp %104 : vector<8x256xf32>
    %cst_34 = arith.constant 1.000000e+00 : f32
    %106 = vector.broadcast %cst_34 : f32 to vector<8x256xf32>
    %107 = arith.addf %106, %105 : vector<8x256xf32>
    %108 = arith.divf %106, %107 : vector<8x256xf32>
    %109 = math.tanh %103 : vector<8x256xf32>
    %110 = vector.extract_strided_slice %108 {offsets = [0, 0], sizes = [8, 64], strides = [1, 1]} : vector<8x256xf32> to vector<8x64xf32>
    %111 = vector.extract_strided_slice %108 {offsets = [0, 64], sizes = [8, 64], strides = [1, 1]} : vector<8x256xf32> to vector<8x64xf32>
    %112 = vector.extract_strided_slice %109 {offsets = [0, 128], sizes = [8, 64], strides = [1, 1]} : vector<8x256xf32> to vector<8x64xf32>
    %113 = vector.extract_strided_slice %108 {offsets = [0, 192], sizes = [8, 64], strides = [1, 1]} : vector<8x256xf32> to vector<8x64xf32>
    %114 = arith.mulf %111, %95 : vector<8x64xf32>
    %115 = arith.mulf %110, %112 : vector<8x64xf32>
    %116 = arith.addf %114, %115 : vector<8x64xf32>
    %117 = math.tanh %116 : vector<8x64xf32>
    %118 = arith.mulf %113, %117 : vector<8x64xf32>
    %c5_i32 = arith.constant 5 : i32
    %c8_i32_35 = arith.constant 8 : i32
    %119 = arith.muli %c5_i32, %c8_i32_35 : i32
    %120 = tpu.assume_multiple %119, 8 : i32
    %cst_36 = arith.constant dense<0.000000e+00> : vector<8x256xf32>
    %121 = tpu.matmul %118, %11, %cst_36 {dimension_numbers = #tpu.dot_dimension_numbers<[1], [0], [0], [1], [0, 0, 1, 1], [], []>} : vector<8x64xf32>, vector<64x256xf32>, vector<8x256xf32> -> vector<8x256xf32>
    %122 = arith.index_cast %120 : i32 to index
    %c0_37 = arith.constant 0 : index
    %123 = vector.load %arg7[%122, %c0_37] : memref<64x256xf32, #tpu.memory_space<vmem>>, vector<8x256xf32>
    %124 = arith.addf %121, %123 : vector<8x256xf32>
    %125 = arith.negf %124 : vector<8x256xf32>
    %126 = math.exp %125 : vector<8x256xf32>
    %cst_38 = arith.constant 1.000000e+00 : f32
    %127 = vector.broadcast %cst_38 : f32 to vector<8x256xf32>
    %128 = arith.addf %127, %126 : vector<8x256xf32>
    %129 = arith.divf %127, %128 : vector<8x256xf32>
    %130 = math.tanh %124 : vector<8x256xf32>
    %131 = vector.extract_strided_slice %129 {offsets = [0, 0], sizes = [8, 64], strides = [1, 1]} : vector<8x256xf32> to vector<8x64xf32>
    %132 = vector.extract_strided_slice %129 {offsets = [0, 64], sizes = [8, 64], strides = [1, 1]} : vector<8x256xf32> to vector<8x64xf32>
    %133 = vector.extract_strided_slice %130 {offsets = [0, 128], sizes = [8, 64], strides = [1, 1]} : vector<8x256xf32> to vector<8x64xf32>
    %134 = vector.extract_strided_slice %129 {offsets = [0, 192], sizes = [8, 64], strides = [1, 1]} : vector<8x256xf32> to vector<8x64xf32>
    %135 = arith.mulf %132, %116 : vector<8x64xf32>
    %136 = arith.mulf %131, %133 : vector<8x64xf32>
    %137 = arith.addf %135, %136 : vector<8x64xf32>
    %138 = math.tanh %137 : vector<8x64xf32>
    %139 = arith.mulf %134, %138 : vector<8x64xf32>
    %c6_i32 = arith.constant 6 : i32
    %c8_i32_39 = arith.constant 8 : i32
    %140 = arith.muli %c6_i32, %c8_i32_39 : i32
    %141 = tpu.assume_multiple %140, 8 : i32
    %cst_40 = arith.constant dense<0.000000e+00> : vector<8x256xf32>
    %142 = tpu.matmul %139, %11, %cst_40 {dimension_numbers = #tpu.dot_dimension_numbers<[1], [0], [0], [1], [0, 0, 1, 1], [], []>} : vector<8x64xf32>, vector<64x256xf32>, vector<8x256xf32> -> vector<8x256xf32>
    %143 = arith.index_cast %141 : i32 to index
    %c0_41 = arith.constant 0 : index
    %144 = vector.load %arg7[%143, %c0_41] : memref<64x256xf32, #tpu.memory_space<vmem>>, vector<8x256xf32>
    %145 = arith.addf %142, %144 : vector<8x256xf32>
    %146 = arith.negf %145 : vector<8x256xf32>
    %147 = math.exp %146 : vector<8x256xf32>
    %cst_42 = arith.constant 1.000000e+00 : f32
    %148 = vector.broadcast %cst_42 : f32 to vector<8x256xf32>
    %149 = arith.addf %148, %147 : vector<8x256xf32>
    %150 = arith.divf %148, %149 : vector<8x256xf32>
    %151 = math.tanh %145 : vector<8x256xf32>
    %152 = vector.extract_strided_slice %150 {offsets = [0, 0], sizes = [8, 64], strides = [1, 1]} : vector<8x256xf32> to vector<8x64xf32>
    %153 = vector.extract_strided_slice %150 {offsets = [0, 64], sizes = [8, 64], strides = [1, 1]} : vector<8x256xf32> to vector<8x64xf32>
    %154 = vector.extract_strided_slice %151 {offsets = [0, 128], sizes = [8, 64], strides = [1, 1]} : vector<8x256xf32> to vector<8x64xf32>
    %155 = vector.extract_strided_slice %150 {offsets = [0, 192], sizes = [8, 64], strides = [1, 1]} : vector<8x256xf32> to vector<8x64xf32>
    %156 = arith.mulf %153, %137 : vector<8x64xf32>
    %157 = arith.mulf %152, %154 : vector<8x64xf32>
    %158 = arith.addf %156, %157 : vector<8x64xf32>
    %159 = math.tanh %158 : vector<8x64xf32>
    %160 = arith.mulf %155, %159 : vector<8x64xf32>
    %c7_i32 = arith.constant 7 : i32
    %c8_i32_43 = arith.constant 8 : i32
    %161 = arith.muli %c7_i32, %c8_i32_43 : i32
    %162 = tpu.assume_multiple %161, 8 : i32
    %cst_44 = arith.constant dense<0.000000e+00> : vector<8x256xf32>
    %163 = tpu.matmul %160, %11, %cst_44 {dimension_numbers = #tpu.dot_dimension_numbers<[1], [0], [0], [1], [0, 0, 1, 1], [], []>} : vector<8x64xf32>, vector<64x256xf32>, vector<8x256xf32> -> vector<8x256xf32>
    %164 = arith.index_cast %162 : i32 to index
    %c0_45 = arith.constant 0 : index
    %165 = vector.load %arg7[%164, %c0_45] : memref<64x256xf32, #tpu.memory_space<vmem>>, vector<8x256xf32>
    %166 = arith.addf %163, %165 : vector<8x256xf32>
    %167 = arith.negf %166 : vector<8x256xf32>
    %168 = math.exp %167 : vector<8x256xf32>
    %cst_46 = arith.constant 1.000000e+00 : f32
    %169 = vector.broadcast %cst_46 : f32 to vector<8x256xf32>
    %170 = arith.addf %169, %168 : vector<8x256xf32>
    %171 = arith.divf %169, %170 : vector<8x256xf32>
    %172 = math.tanh %166 : vector<8x256xf32>
    %173 = vector.extract_strided_slice %171 {offsets = [0, 0], sizes = [8, 64], strides = [1, 1]} : vector<8x256xf32> to vector<8x64xf32>
    %174 = vector.extract_strided_slice %171 {offsets = [0, 64], sizes = [8, 64], strides = [1, 1]} : vector<8x256xf32> to vector<8x64xf32>
    %175 = vector.extract_strided_slice %172 {offsets = [0, 128], sizes = [8, 64], strides = [1, 1]} : vector<8x256xf32> to vector<8x64xf32>
    %176 = vector.extract_strided_slice %171 {offsets = [0, 192], sizes = [8, 64], strides = [1, 1]} : vector<8x256xf32> to vector<8x64xf32>
    %177 = arith.mulf %174, %158 : vector<8x64xf32>
    %178 = arith.mulf %173, %175 : vector<8x64xf32>
    %179 = arith.addf %177, %178 : vector<8x64xf32>
    %180 = math.tanh %179 : vector<8x64xf32>
    %181 = arith.mulf %176, %180 : vector<8x64xf32>
    %c8_i32_47 = arith.constant 8 : i32
    %c0_48 = arith.constant 0 : index
    %c0_49 = arith.constant 0 : index
    %182 = vector.load %arg8[%c0_48, %c0_49] : memref<8x64xf32, #tpu.memory_space<vmem>>, vector<8x64xf32>
    tpu.vector_store %arg8[%c0_48, %c0_49], %181 {strides = array<i32>} : memref<8x64xf32, #tpu.memory_space<vmem>>, vector<8x64xf32>,
    %c0_50 = arith.constant 0 : index
    %c0_51 = arith.constant 0 : index
    %183 = vector.load %arg9[%c0_50, %c0_51] : memref<8x64xf32, #tpu.memory_space<vmem>>, vector<8x64xf32>
    tpu.vector_store %arg9[%c0_50, %c0_51], %179 {strides = array<i32>} : memref<8x64xf32, #tpu.memory_space<vmem>>, vector<8x64xf32>,
    %c0_i32_52 = arith.constant 0 : i32
    %184 = arith.cmpi eq, %arg1, %c0_i32_52 : i32
    %185 = arith.extui %184 : i1 to i32
    %c0_i32_53 = arith.constant 0 : i32
    %186 = arith.cmpi ne, %185, %c0_i32_53 : i32
    scf.if %186 {
      %cst_54 = arith.constant dense<0.000000e+00> : vector<8x256xf32>
      %187 = tpu.matmul %181, %11, %cst_54 {dimension_numbers = #tpu.dot_dimension_numbers<[1], [0], [0], [1], [0, 0, 1, 1], [], []>} : vector<8x64xf32>, vector<64x256xf32>, vector<8x256xf32> -> vector<8x256xf32>
      %c0_55 = arith.constant 0 : index
      %c0_56 = arith.constant 0 : index
      %188 = vector.load %arg5[%c0_55, %c0_56] : memref<1x256xf32, #tpu.memory_space<vmem>>, vector<1x256xf32>
      %189 = vector.broadcast %188 : vector<1x256xf32> to vector<8x256xf32>
      %190 = arith.addf %187, %189 : vector<8x256xf32>
      %191 = arith.negf %190 : vector<8x256xf32>
      %192 = math.exp %191 : vector<8x256xf32>
      %cst_57 = arith.constant 1.000000e+00 : f32
      %193 = vector.broadcast %cst_57 : f32 to vector<8x256xf32>
      %194 = arith.addf %193, %192 : vector<8x256xf32>
      %195 = arith.divf %193, %194 : vector<8x256xf32>
      %196 = math.tanh %190 : vector<8x256xf32>
      %197 = vector.extract_strided_slice %195 {offsets = [0, 0], sizes = [8, 64], strides = [1, 1]} : vector<8x256xf32> to vector<8x64xf32>
      %198 = vector.extract_strided_slice %195 {offsets = [0, 64], sizes = [8, 64], strides = [1, 1]} : vector<8x256xf32> to vector<8x64xf32>
      %199 = vector.extract_strided_slice %196 {offsets = [0, 128], sizes = [8, 64], strides = [1, 1]} : vector<8x256xf32> to vector<8x64xf32>
      %200 = vector.extract_strided_slice %195 {offsets = [0, 192], sizes = [8, 64], strides = [1, 1]} : vector<8x256xf32> to vector<8x64xf32>
      %201 = arith.mulf %198, %179 : vector<8x64xf32>
      %202 = arith.mulf %197, %199 : vector<8x64xf32>
      %203 = arith.addf %201, %202 : vector<8x64xf32>
      %204 = math.tanh %203 : vector<8x64xf32>
      %205 = arith.mulf %200, %204 : vector<8x64xf32>
      %206 = vector.extract_strided_slice %205 {offsets = [0, 32], sizes = [8, 32], strides = [1, 1]} : vector<8x64xf32> to vector<8x32xf32>
      %c0_58 = arith.constant 0 : index
      %c0_59 = arith.constant 0 : index
      %c0_60 = arith.constant 0 : index
      %207 = vector.load %arg6[%c0_58, %c0_59, %c0_60] : memref<1x8x32xf32, #tpu.memory_space<vmem>>, vector<1x8x32xf32>
      %208 = vector.shape_cast %207 : vector<1x8x32xf32> to vector<8x32xf32>
      %209 = vector.shape_cast %206 : vector<8x32xf32> to vector<1x8x32xf32>
      tpu.vector_store %arg6[%c0_58, %c0_59, %c0_60], %209 {strides = array<i32>} : memref<1x8x32xf32, #tpu.memory_space<vmem>>, vector<1x8x32xf32>,
    } else {
    }
    return
  }
  func.func @transform_0(%arg0: i32, %arg1: i32) -> (i32, i32, i32) {
    %c0_i32 = arith.constant 0 : i32
    %c0_i32_0 = arith.constant 0 : i32
    return %arg0, %arg1, %c0_i32 : i32, i32, i32
  }
  func.func @transform_1(%arg0: i32, %arg1: i32) -> (i32, i32) {
    %c0_i32 = arith.constant 0 : i32
    %c0_i32_0 = arith.constant 0 : i32
    %c0_i32_1 = arith.constant 0 : i32
    return %c0_i32, %c0_i32_0 : i32, i32
  }
  func.func @transform_2(%arg0: i32, %arg1: i32) -> (i32, i32) {
    %c0_i32 = arith.constant 0 : i32
    %c0_i32_0 = arith.constant 0 : i32
    %c0_i32_1 = arith.constant 0 : i32
    return %c0_i32, %c0_i32_0 : i32, i32
  }
  func.func @transform_3(%arg0: i32, %arg1: i32) -> (i32, i32) {
    %c0_i32 = arith.constant 0 : i32
    %c0_i32_0 = arith.constant 0 : i32
    %c0_i32_1 = arith.constant 0 : i32
    return %c0_i32, %c0_i32_0 : i32, i32
  }
  func.func @transform_4(%arg0: i32, %arg1: i32) -> (i32, i32, i32) {
    %c0_i32 = arith.constant 0 : i32
    %c0_i32_0 = arith.constant 0 : i32
    %c0_i32_1 = arith.constant 0 : i32
    return %arg0, %c0_i32, %c0_i32_0 : i32, i32, i32
  }
}

</mosaic_0001>

<llo_original>
// kernel: _cross_encoder_forward_impl.1
$region0: #{_cross_encoder_forward_impl.1}
  #allocation0 [shape = 'u32[]', space=smem, size = 0x4, offset = 0x4, fixed_abs, tag = 'smem constant byte address 0x4 - core index']
  #allocation1 [shape = 'u32[144,128]{1,0:T(1,128)}', space=vmem, size = 0x12000, scoped, tag = 'internal scratch']
  #allocation2 [shape = 'f32[64,256]{1,0:T(8,128)}', space=vmem, size = 0x10000, scoped, tag = 'scratch operand']
  #allocation3 [shape = 'f32[8,64]{1,0:T(8,128)}', space=vmem, size = 0x1000, scoped, tag = 'scratch operand']
  #allocation4 [shape = 'f32[8,64]{1,0:T(8,128)}', space=vmem, size = 0x1000, scoped, tag = 'scratch operand']
  %s0 = inlined_call_operand.vmem [shape: f32[1,64,4], index: 0, kind: input, shape index: {}]
  %s1 = inlined_call_operand.vmem [shape: f32[4,256], index: 1, kind: input, shape index: {}]
  %s2 = inlined_call_operand.vmem [shape: f32[64,256], index: 2, kind: input, shape index: {}]
  %s3 = inlined_call_operand.vmem [shape: f32[1,256], index: 3, kind: input, shape index: {}]
  %s4 = inlined_call_operand.vmem [shape: f32[1,8,32], index: 4, kind: output, shape index: {}]
  %s5 = sld [smem:[#allocation0]]
  $region34: #{_cross_encoder_forward_impl.1} parent=0
    _
  %s7 = ssub.s32 1, %s5
  %s8 = scalar_select 0, %s7, %s5
  // Predicated region
  $region2: #{_cross_encoder_forward_impl.1} parent=0 // pred_check
    _
  $region3: #{_cross_encoder_forward_impl.1} parent=0 // pred_check_branch
    %10 = sbr.rel (0) target = $region5
  $region4: #{_cross_encoder_forward_impl.1} parent=0 // pred_region
    _
  $region5: #{_cross_encoder_forward_impl.1} parent=0 // pred_fallthru
    _
  // Predicated region
  $region6: #{_cross_encoder_forward_impl.1} parent=0 // pred_check
    _
  $region7: #{_cross_encoder_forward_impl.1} parent=0 // pred_check_branch
    %12 = sbr.rel (0) target = $region9
  $region8: #{_cross_encoder_forward_impl.1} parent=0 // pred_region
    _
  $region9: #{_cross_encoder_forward_impl.1} parent=0 // pred_fallthru
    _
  // Predicated region
  $region10: #{_cross_encoder_forward_impl.1} parent=0 // pred_check
    _
  $region11: #{_cross_encoder_forward_impl.1} parent=0 // pred_check_branch
    %14 = sbr.rel (0) target = $region13
  $region12: #{_cross_encoder_forward_impl.1} parent=0 // pred_region
    _
  $region13: #{_cross_encoder_forward_impl.1} parent=0 // pred_fallthru
    _
  // Predicated region
  $region14: #{_cross_encoder_forward_impl.1} parent=0 // pred_check
    _
  $region15: #{_cross_encoder_forward_impl.1} parent=0 // pred_check_branch
    %16 = sbr.rel (0) target = $region17
  $region16: #{_cross_encoder_forward_impl.1} parent=0 // pred_region
    _
  $region17: #{_cross_encoder_forward_impl.1} parent=0 // pred_fallthru
    _
  %v17 = vld [vmem:[%s0] sm:$0xff]
  %v18 = vld [vmem:[%s0 + $0x8] sm:$0xff]
  %v19 = vld [vmem:[%s0 + $0x10] sm:$0xff]
  %v20 = vld [vmem:[%s0 + $0x18] sm:$0xff]
  %v21 = vld [vmem:[%s0 + $0x20] sm:$0xff]
  %v22 = vld [vmem:[%s0 + $0x28] sm:$0xff]
  %v23 = vld [vmem:[%s0 + $0x30] sm:$0xff]
  %v24 = vld [vmem:[%s0 + $0x38] sm:$0xff]
  %v25 = vld [vmem:[%s1] sm:$0xff]
  %v26 = vld [vmem:[%s3] sm:$0x3]
  %v28 = vlaneseq
  %v29 = vshrl.u32 %v28, 7
  %v30 = vsub.s32 0, %v29
  %v31 = vrot.slane %v26, %v30
  %v32 = vlaneseq
  %v33 = vshrl.u32 %v32, 7
  %v34 = vsub.s32 1, %v33
  %v35 = vrot.slane %v26, %v34
  %v39 = vcombine.high %v25, %v25
  %vm40 = vcmask 31744
  %v42 = vsel %vm40, %v17, 0
  %v45 = vsel %vm40, %v18, 0
  %v48 = vsel %vm40, %v19, 0
  %v51 = vsel %vm40, %v20, 0
  %v54 = vsel %vm40, %v21, 0
  %v57 = vsel %vm40, %v22, 0
  %v60 = vsel %vm40, %v23, 0
  %v63 = vsel %vm40, %v24, 0
  %vm65 = vcmask 1043456
  %v66 = vsel %vm65, %v25, 0
  %v68 = vsel %vm65, %v39, 0
  %70 = vmatprep.subr.mxu0 %v68
  %71 = vmatpush1.msra.mxu0 %v66
  %72 = vmatprep.subr.mxu0 0.0
  %73 = vmatpush1.msra.mxu0 0.0
  %74 = vmatprep.subr.mxu0 0.0
  %75 = vmatpush1.msra.mxu0 0.0
  %76 = vmatprep.subr.mxu0 0.0
  %77 = vmatpush1.msra.mxu0 0.0
  %78 = vmatprep.subr.mxu0 0.0
  %79 = vmatpush1.msra.mxu0 0.0
  %80 = vmatprep.subr.mxu0 0.0
  %81 = vmatpush1.msra.mxu0 0.0
  %82 = vmatprep.subr.mxu0 0.0
  %83 = vmatpush1.msra.mxu0 0.0
  %84 = vmatprep.subr.mxu0 0.0
  %85 = vmatpush1.msra.mxu0 0.0
  %86 = vmatprep.subr.mxu0 0.0
  %87 = vmatpush1.msra.mxu0 0.0
  %88 = vmatprep.subr.mxu0 0.0
  %89 = vmatpush1.msra.mxu0 0.0
  %90 = vmatprep.subr.mxu0 0.0
  %91 = vmatpush1.msra.mxu0 0.0
  %92 = vmatprep.subr.mxu0 0.0
  %93 = vmatpush1.msra.mxu0 0.0
  %94 = vmatprep.subr.mxu0 0.0
  %95 = vmatpush1.msra.mxu0 0.0
  %96 = vmatprep.subr.mxu0 0.0
  %97 = vmatpush1.msra.mxu0 0.0
  %98 = vmatprep.subr.mxu0 0.0
  %99 = vmatpush1.msra.mxu0 0.0
  %100 = vmatprep.subr.mxu0 0.0
  %101 = vmatpush1.msra.mxu0 0.0
  %102 = vmatprep.subr.mxu0 0.0
  %103 = vmatpush1.msra.mxu0 0.0
  %104 = vmatprep.subr.mxu0 0.0
  %105 = vmatpush1.msra.mxu0 0.0
  %106 = vmatprep.subr.mxu0 0.0
  %107 = vmatpush1.msra.mxu0 0.0
  %108 = vmatprep.subr.mxu0 0.0
  %109 = vmatpush1.msra.mxu0 0.0
  %110 = vmatprep.subr.mxu0 0.0
  %111 = vmatpush1.msra.mxu0 0.0
  %112 = vmatprep.subr.mxu0 0.0
  %113 = vmatpush1.msra.mxu0 0.0
  %114 = vmatprep.subr.mxu0 0.0
  %115 = vmatpush1.msra.mxu0 0.0
  %116 = vmatprep.subr.mxu0 0.0
  %117 = vmatpush1.msra.mxu0 0.0
  %118 = vmatprep.subr.mxu0 0.0
  %119 = vmatpush1.msra.mxu0 0.0
  %120 = vmatprep.subr.mxu0 0.0
  %121 = vmatpush1.msra.mxu0 0.0
  %122 = vmatprep.subr.mxu0 0.0
  %123 = vmatpush1.msra.mxu0 0.0
  %124 = vmatprep.subr.mxu0 0.0
  %125 = vmatpush1.msra.mxu0 0.0
  %126 = vmatprep.subr.mxu0 0.0
  %127 = vmatpush1.msra.mxu0 0.0
  %128 = vmatprep.subr.mxu0 0.0
  %129 = vmatpush1.msra.mxu0 0.0
  %130 = vmatprep.subr.mxu0 0.0
  %131 = vmatpush1.msra.mxu0 0.0
  %132 = vmatprep.subr.mxu0 0.0
  %133 = vmatpush1.msra.mxu0 0.0
  %134 = vmatprep.mubr.f32.mxu0 0.0
  %135 = vmatmul.mubr.f32.gmra.mrb[0].mxu0 %v42
  %v136 = vpop.f32.mrb[0].mxu0
  %v137 = vadd.f32 %v31, %v136
  %v138 = vpop.f32.mrb[0].mxu0
  %v139 = vadd.f32 %v35, %v138
  %140 = vmatprep.mubr.f32.mxu0 0.0
  %141 = vmatmul.mubr.f32.gmra.mrb[0].mxu0 %v45
  %v142 = vpop.f32.mrb[0].mxu0
  %v143 = vadd.f32 %v31, %v142
  %v144 = vpop.f32.mrb[0].mxu0
  %v145 = vadd.f32 %v35, %v144
  %146 = vmatprep.mubr.f32.mxu0 0.0
  %147 = vmatmul.mubr.f32.gmra.mrb[0].mxu0 %v48
  %v148 = vpop.f32.mrb[0].mxu0
  %v149 = vadd.f32 %v31, %v148
  %v150 = vpop.f32.mrb[0].mxu0
  %v151 = vadd.f32 %v35, %v150
  %152 = vmatprep.mubr.f32.mxu0 0.0
  %153 = vmatmul.mubr.f32.gmra.mrb[0].mxu0 %v51
  %v154 = vpop.f32.mrb[0].mxu0
  %v155 = vadd.f32 %v31, %v154
  %v156 = vpop.f32.mrb[0].mxu0
  %v157 = vadd.f32 %v35, %v156
  %158 = vmatprep.mubr.f32.mxu0 0.0
  %159 = vmatmul.mubr.f32.gmra.mrb[0].mxu0 %v54
  %v160 = vpop.f32.mrb[0].mxu0
  %v161 = vadd.f32 %v31, %v160
  %v162 = vpop.f32.mrb[0].mxu0
  %v163 = vadd.f32 %v35, %v162
  %164 = vmatprep.mubr.f32.mxu0 0.0
  %165 = vmatmul.mubr.f32.gmra.mrb[0].mxu0 %v57
  %v166 = vpop.f32.mrb[0].mxu0
  %v167 = vadd.f32 %v31, %v166
  %v168 = vpop.f32.mrb[0].mxu0
  %v169 = vadd.f32 %v35, %v168
  %170 = vmatprep.mubr.f32.mxu0 0.0
  %171 = vmatmul.mubr.f32.gmra.mrb[0].mxu0 %v60
  %v172 = vpop.f32.mrb[0].mxu0
  %v173 = vadd.f32 %v31, %v172
  %v174 = vpop.f32.mrb[0].mxu0
  %v175 = vadd.f32 %v35, %v174
  %176 = vmatprep.mubr.f32.mxu0 0.0
  %177 = vmatmul.mubr.f32.gmra.mrb[0].mxu0 %v63
  %v178 = vpop.f32.mrb[0].mxu0
  %v179 = vadd.f32 %v31, %v178
  %v180 = vpop.f32.mrb[0].mxu0
  %v181 = vadd.f32 %v35, %v180
  %182 = vdwg.mxu0
  %183 = vst [vmem:[#allocation2] sm:$0xff] %v137
  %184 = vst [vmem:[#allocation2 + $0x8] sm:$0xff] %v139
  %185 = vst [vmem:[#allocation2 + $0x10] sm:$0xff] %v143
  %186 = vst [vmem:[#allocation2 + $0x18] sm:$0xff] %v145
  %187 = vst [vmem:[#allocation2 + $0x20] sm:$0xff] %v149
  %188 = vst [vmem:[#allocation2 + $0x28] sm:$0xff] %v151
  %189 = vst [vmem:[#allocation2 + $0x30] sm:$0xff] %v155
  %190 = vst [vmem:[#allocation2 + $0x38] sm:$0xff] %v157
  %191 = vst [vmem:[#allocation2 + $0x40] sm:$0xff] %v161
  %192 = vst [vmem:[#allocation2 + $0x48] sm:$0xff] %v163
  %193 = vst [vmem:[#allocation2 + $0x50] sm:$0xff] %v167
  %194 = vst [vmem:[#allocation2 + $0x58] sm:$0xff] %v169
  %195 = vst [vmem:[#allocation2 + $0x60] sm:$0xff] %v173
  %196 = vst [vmem:[#allocation2 + $0x68] sm:$0xff] %v175
  %197 = vst [vmem:[#allocation2 + $0x70] sm:$0xff] %v179
  %198 = vst [vmem:[#allocation2 + $0x78] sm:$0xff] %v181
  %p199 = scmp.eq.s32.totalorder 0, 0
  // Predicated region
  $region18: #{_cross_encoder_forward_impl.1} parent=0 // pred_check
    %p200 = pneg %p199
  $region19: #{_cross_encoder_forward_impl.1} parent=0 // pred_check_branch
    %202 = sbr.rel (%p200) target = $region21
  $region20: #{_cross_encoder_forward_impl.1} parent=0 // pred_region
    %vm203 = vcmask 523264
    %204 = vst.msk [vmem:[#allocation3] sm:$0xff] %vm203, 0.0
    %205 = vst.msk [vmem:[#allocation4] sm:$0xff] %vm203, 0.0
    %vm206 = vcmask 523520
    %207 = vst.msk [vmem:[#allocation2] sm:$0xff] %vm206, 0.0
    %vm208 = vcmask 1048320
    %209 = vst.msk [vmem:[#allocation2] sm:$0xff] %vm208, 0.0
    %210 = vst.msk [vmem:[#allocation2 + $0x8] sm:$0xff] %vm206, 0.0
    %211 = vst.msk [vmem:[#allocation2 + $0x8] sm:$0xff] %vm208, 0.0
  $region21: #{_cross_encoder_forward_impl.1} parent=0 // pred_fallthru
    _
  %v212 = vld [vmem:[%s2] sm:$0xff]
  %v213 = vld [vmem:[%s2 + $0x8] sm:$0xff]
  %v214 = vld [vmem:[%s2 + $0x10] sm:$0xff]
  %v215 = vld [vmem:[%s2 + $0x18] sm:$0xff]
  %v216 = vld [vmem:[%s2 + $0x20] sm:$0xff]
  %v217 = vld [vmem:[%s2 + $0x28] sm:$0xff]
  %v218 = vld [vmem:[%s2 + $0x30] sm:$0xff]
  %v219 = vld [vmem:[%s2 + $0x38] sm:$0xff]
  %v220 = vld [vmem:[%s2 + $0x40] sm:$0xff]
  %v221 = vld [vmem:[%s2 + $0x48] sm:$0xff]
  %v222 = vld [vmem:[%s2 + $0x50] sm:$0xff]
  %v223 = vld [vmem:[%s2 + $0x58] sm:$0xff]
  %v224 = vld [vmem:[%s2 + $0x60] sm:$0xff]
  %v225 = vld [vmem:[%s2 + $0x68] sm:$0xff]
  %v226 = vld [vmem:[%s2 + $0x70] sm:$0xff]
  %v227 = vld [vmem:[%s2 + $0x78] sm:$0xff]
  %v228 = vld [vmem:[#allocation3] sm:$0xff]
  %v229 = vld [vmem:[#allocation4] sm:$0xff]
  %s230 = smul.u32 0, 2
  %s231 = smul.addr %s230, 8
  %s232 = scalar_lea.vmem [#allocation2], %s231
  %v233 = vld [vmem:[%s232] sm:$0xff]
  %v234 = vld [vmem:[%s232 + $0x8] sm:$0xff]
  %vm235 = vcmask 523264
  %v237 = vsel %vm235, %v228, 0
  %239 = vmatprep.subr.mxu0 %v213
  %240 = vmatpush1.msra.mxu0 %v212
  %241 = vmatprep.subr.mxu0 %v215
  %242 = vmatpush1.msra.mxu0 %v214
  %243 = vmatprep.subr.mxu0 %v217
  %244 = vmatpush1.msra.mxu0 %v216
  %245 = vmatprep.subr.mxu0 %v219
  %246 = vmatpush1.msra.mxu0 %v218
  %247 = vmatprep.subr.mxu0 %v221
  %248 = vmatpush1.msra.mxu0 %v220
  %249 = vmatprep.subr.mxu0 %v223
  %250 = vmatpush1.msra.mxu0 %v222
  %251 = vmatprep.subr.mxu0 %v225
  %252 = vmatpush1.msra.mxu0 %v224
  %253 = vmatprep.subr.mxu0 %v227
  %254 = vmatpush1.msra.mxu0 %v226
  %255 = vmatprep.subr.mxu0 0.0
  %256 = vmatpush1.msra.mxu0 0.0
  %257 = vmatprep.subr.mxu0 0.0
  %258 = vmatpush1.msra.mxu0 0.0
  %259 = vmatprep.subr.mxu0 0.0
  %260 = vmatpush1.msra.mxu0 0.0
  %261 = vmatprep.subr.mxu0 0.0
  %262 = vmatpush1.msra.mxu0 0.0
  %263 = vmatprep.subr.mxu0 0.0
  %264 = vmatpush1.msra.mxu0 0.0
  %265 = vmatprep.subr.mxu0 0.0
  %266 = vmatpush1.msra.mxu0 0.0
  %267 = vmatprep.subr.mxu0 0.0
  %268 = vmatpush1.msra.mxu0 0.0
  %269 = vmatprep.subr.mxu0 0.0
  %270 = vmatpush1.msra.mxu0 0.0
  %271 = vmatprep.subr.mxu0 0.0
  %272 = vmatpush1.msra.mxu0 0.0
  %273 = vmatprep.subr.mxu0 0.0
  %274 = vmatpush1.msra.mxu0 0.0
  %275 = vmatprep.subr.mxu0 0.0
  %276 = vmatpush1.msra.mxu0 0.0
  %277 = vmatprep.subr.mxu0 0.0
  %278 = vmatpush1.msra.mxu0 0.0
  %279 = vmatprep.subr.mxu0 0.0
  %280 = vmatpush1.msra.mxu0 0.0
  %281 = vmatprep.subr.mxu0 0.0
  %282 = vmatpush1.msra.mxu0 0.0
  %283 = vmatprep.subr.mxu0 0.0
  %284 = vmatpush1.msra.mxu0 0.0
  %285 = vmatprep.subr.mxu0 0.0
  %286 = vmatpush1.msra.mxu0 0.0
  %287 = vmatprep.subr.mxu0 0.0
  %288 = vmatpush1.msra.mxu0 0.0
  %289 = vmatprep.subr.mxu0 0.0
  %290 = vmatpush1.msra.mxu0 0.0
  %291 = vmatprep.subr.mxu0 0.0
  %292 = vmatpush1.msra.mxu0 0.0
  %293 = vmatprep.subr.mxu0 0.0
  %294 = vmatpush1.msra.mxu0 0.0
  %295 = vmatprep.subr.mxu0 0.0
  %296 = vmatpush1.msra.mxu0 0.0
  %297 = vmatprep.subr.mxu0 0.0
  %298 = vmatpush1.msra.mxu0 0.0
  %299 = vmatprep.subr.mxu0 0.0
  %300 = vmatpush1.msra.mxu0 0.0
  %301 = vmatprep.subr.mxu0 0.0
  %302 = vmatpush1.msra.mxu0 0.0
  %303 = vmatprep.mubr.f32.mxu0 0.0
  %304 = vmatmul.mubr.f32.gmra.mrb[0].mxu0 %v237
  %v305 = vpop.f32.mrb[0].mxu0
  %v306 = vadd.f32 %v233, %v305
  %v307 = vpop.f32.mrb[0].mxu0
  %v308 = vadd.f32 %v234, %v307
  %309 = vdwg.mxu0
  %v310 = vxor.u32 %v306, 2147483648
  %v311 = vxor.u32 %v308, 2147483648
  %v312 = vmul.f32 %v310, 1.442695
  %v313 = vpow.pop %v312
  %v314 = vmul.f32 %v311, 1.442695
  %v315 = vpow.pop %v314
  %v316 = vadd.f32 %v313, 1.0
  %v317 = vadd.f32 %v315, 1.0
  %v318 = vrcp.pop %v316
  %v319 = vmul.f32 1.0, %v318
  %v320 = vrcp.pop %v317
  %v321 = vmul.f32 1.0, %v320
  %v322 = vtanh.pop %v308
  %324 = vrot.lane.b32.xlu0 %v229, 64
  %v325 = vpop.permute.xlu0 %324
  %v327 = vmul.f32 %v319, %v325
  %v328 = vmul.f32 %v319, %v322
  %330 = vrot.lane.b32.xlu0 %v328, 64
  %v331 = vpop.permute.xlu0 %330
  %v333 = vadd.f32 %v327, %v331
  %v334 = vtanh.pop %v333
  %v335 = vmul.f32 %v321, %v334
  %s336 = smul.u32 1, 2
  %s337 = smul.addr %s336, 8
  %s338 = scalar_lea.vmem [#allocation2], %s337
  %v339 = vld [vmem:[%s338] sm:$0xff]
  %v340 = vld [vmem:[%s338 + $0x8] sm:$0xff]
  %342 = vrot.lane.b32.xlu0 %v335, 64
  %v343 = vpop.permute.xlu0 %342
  %v344 = vsel %vm235, %v343, 0
  %346 = vmatprep.subr.mxu0 %v213
  %347 = vmatpush1.msra.mxu0 %v212
  %348 = vmatprep.subr.mxu0 %v215
  %349 = vmatpush1.msra.mxu0 %v214
  %350 = vmatprep.subr.mxu0 %v217
  %351 = vmatpush1.msra.mxu0 %v216
  %352 = vmatprep.subr.mxu0 %v219
  %353 = vmatpush1.msra.mxu0 %v218
  %354 = vmatprep.subr.mxu0 %v221
  %355 = vmatpush1.msra.mxu0 %v220
  %356 = vmatprep.subr.mxu0 %v223
  %357 = vmatpush1.msra.mxu0 %v222
  %358 = vmatprep.subr.mxu0 %v225
  %359 = vmatpush1.msra.mxu0 %v224
  %360 = vmatprep.subr.mxu0 %v227
  %361 = vmatpush1.msra.mxu0 %v226
  %362 = vmatprep.subr.mxu0 0.0
  %363 = vmatpush1.msra.mxu0 0.0
  %364 = vmatprep.subr.mxu0 0.0
  %365 = vmatpush1.msra.mxu0 0.0
  %366 = vmatprep.subr.mxu0 0.0
  %367 = vmatpush1.msra.mxu0 0.0
  %368 = vmatprep.subr.mxu0 0.0
  %369 = vmatpush1.msra.mxu0 0.0
  %370 = vmatprep.subr.mxu0 0.0
  %371 = vmatpush1.msra.mxu0 0.0
  %372 = vmatprep.subr.mxu0 0.0
  %373 = vmatpush1.msra.mxu0 0.0
  %374 = vmatprep.subr.mxu0 0.0
  %375 = vmatpush1.msra.mxu0 0.0
  %376 = vmatprep.subr.mxu0 0.0
  %377 = vmatpush1.msra.mxu0 0.0
  %378 = vmatprep.subr.mxu0 0.0
  %379 = vmatpush1.msra.mxu0 0.0
  %380 = vmatprep.subr.mxu0 0.0
  %381 = vmatpush1.msra.mxu0 0.0
  %382 = vmatprep.subr.mxu0 0.0
  %383 = vmatpush1.msra.mxu0 0.0
  %384 = vmatprep.subr.mxu0 0.0
  %385 = vmatpush1.msra.mxu0 0.0
  %386 = vmatprep.subr.mxu0 0.0
  %387 = vmatpush1.msra.mxu0 0.0
  %388 = vmatprep.subr.mxu0 0.0
  %389 = vmatpush1.msra.mxu0 0.0
  %390 = vmatprep.subr.mxu0 0.0
  %391 = vmatpush1.msra.mxu0 0.0
  %392 = vmatprep.subr.mxu0 0.0
  %393 = vmatpush1.msra.mxu0 0.0
  %394 = vmatprep.subr.mxu0 0.0
  %395 = vmatpush1.msra.mxu0 0.0
  %396 = vmatprep.subr.mxu0 0.0
  %397 = vmatpush1.msra.mxu0 0.0
  %398 = vmatprep.subr.mxu0 0.0
  %399 = vmatpush1.msra.mxu0 0.0
  %400 = vmatprep.subr.mxu0 0.0
  %401 = vmatpush1.msra.mxu0 0.0
  %402 = vmatprep.subr.mxu0 0.0
  %403 = vmatpush1.msra.mxu0 0.0
  %404 = vmatprep.subr.mxu0 0.0
  %405 = vmatpush1.msra.mxu0 0.0
  %406 = vmatprep.subr.mxu0 0.0
  %407 = vmatpush1.msra.mxu0 0.0
  %408 = vmatprep.subr.mxu0 0.0
  %409 = vmatpush1.msra.mxu0 0.0
  %410 = vmatprep.mubr.f32.mxu0 0.0
  %411 = vmatmul.mubr.f32.gmra.mrb[0].mxu0 %v344
  %v412 = vpop.f32.mrb[0].mxu0
  %v413 = vadd.f32 %v339, %v412
  %v414 = vpop.f32.mrb[0].mxu0
  %v415 = vadd.f32 %v340, %v414
  %416 = vdwg.mxu0
  %v417 = vxor.u32 %v413, 2147483648
  %v418 = vxor.u32 %v415, 2147483648
  %v419 = vmul.f32 %v417, 1.442695
  %v420 = vpow.pop %v419
  %v421 = vmul.f32 %v418, 1.442695
  %v422 = vpow.pop %v421
  %v423 = vadd.f32 %v420, 1.0
  %v424 = vadd.f32 %v422, 1.0
  %v425 = vrcp.pop %v423
  %v426 = vmul.f32 1.0, %v425
  %v427 = vrcp.pop %v424
  %v428 = vmul.f32 1.0, %v427
  %v429 = vtanh.pop %v415
  %v430 = vmul.f32 %v426, %v333
  %v431 = vmul.f32 %v426, %v429
  %433 = vrot.lane.b32.xlu0 %v431, 64
  %v434 = vpop.permute.xlu0 %433
  %v436 = vadd.f32 %v430, %v434
  %v437 = vtanh.pop %v436
  %v438 = vmul.f32 %v428, %v437
  %s439 = smul.u32 2, 2
  %s440 = smul.addr %s439, 8
  %s441 = scalar_lea.vmem [#allocation2], %s440
  %v442 = vld [vmem:[%s441] sm:$0xff]
  %v443 = vld [vmem:[%s441 + $0x8] sm:$0xff]
  %445 = vrot.lane.b32.xlu0 %v438, 64
  %v446 = vpop.permute.xlu0 %445
  %v447 = vsel %vm235, %v446, 0
  %449 = vmatprep.subr.mxu0 %v213
  %450 = vmatpush1.msra.mxu0 %v212
  %451 = vmatprep.subr.mxu0 %v215
  %452 = vmatpush1.msra.mxu0 %v214
  %453 = vmatprep.subr.mxu0 %v217
  %454 = vmatpush1.msra.mxu0 %v216
  %455 = vmatprep.subr.mxu0 %v219
  %456 = vmatpush1.msra.mxu0 %v218
  %457 = vmatprep.subr.mxu0 %v221
  %458 = vmatpush1.msra.mxu0 %v220
  %459 = vmatprep.subr.mxu0 %v223
  %460 = vmatpush1.msra.mxu0 %v222
  %461 = vmatprep.subr.mxu0 %v225
  %462 = vmatpush1.msra.mxu0 %v224
  %463 = vmatprep.subr.mxu0 %v227
  %464 = vmatpush1.msra.mxu0 %v226
  %465 = vmatprep.subr.mxu0 0.0
  %466 = vmatpush1.msra.mxu0 0.0
  %467 = vmatprep.subr.mxu0 0.0
  %468 = vmatpush1.msra.mxu0 0.0
  %469 = vmatprep.subr.mxu0 0.0
  %470 = vmatpush1.msra.mxu0 0.0
  %471 = vmatprep.subr.mxu0 0.0
  %472 = vmatpush1.msra.mxu0 0.0
  %473 = vmatprep.subr.mxu0 0.0
  %474 = vmatpush1.msra.mxu0 0.0
  %475 = vmatprep.subr.mxu0 0.0
  %476 = vmatpush1.msra.mxu0 0.0
  %477 = vmatprep.subr.mxu0 0.0
  %478 = vmatpush1.msra.mxu0 0.0
  %479 = vmatprep.subr.mxu0 0.0
  %480 = vmatpush1.msra.mxu0 0.0
  %481 = vmatprep.subr.mxu0 0.0
  %482 = vmatpush1.msra.mxu0 0.0
  %483 = vmatprep.subr.mxu0 0.0
  %484 = vmatpush1.msra.mxu0 0.0
  %485 = vmatprep.subr.mxu0 0.0
  %486 = vmatpush1.msra.mxu0 0.0
  %487 = vmatprep.subr.mxu0 0.0
  %488 = vmatpush1.msra.mxu0 0.0
  %489 = vmatprep.subr.mxu0 0.0
  %490 = vmatpush1.msra.mxu0 0.0
  %491 = vmatprep.subr.mxu0 0.0
  %492 = vmatpush1.msra.mxu0 0.0
  %493 = vmatprep.subr.mxu0 0.0
  %494 = vmatpush1.msra.mxu0 0.0
  %495 = vmatprep.subr.mxu0 0.0
  %496 = vmatpush1.msra.mxu0 0.0
  %497 = vmatprep.subr.mxu0 0.0
  %498 = vmatpush1.msra.mxu0 0.0
  %499 = vmatprep.subr.mxu0 0.0
  %500 = vmatpush1.msra.mxu0 0.0
  %501 = vmatprep.subr.mxu0 0.0
  %502 = vmatpush1.msra.mxu0 0.0
  %503 = vmatprep.subr.mxu0 0.0
  %504 = vmatpush1.msra.mxu0 0.0
  %505 = vmatprep.subr.mxu0 0.0
  %506 = vmatpush1.msra.mxu0 0.0
  %507 = vmatprep.subr.mxu0 0.0
  %508 = vmatpush1.msra.mxu0 0.0
  %509 = vmatprep.subr.mxu0 0.0
  %510 = vmatpush1.msra.mxu0 0.0
  %511 = vmatprep.subr.mxu0 0.0
  %512 = vmatpush1.msra.mxu0 0.0
  %513 = vmatprep.mubr.f32.mxu0 0.0
  %514 = vmatmul.mubr.f32.gmra.mrb[0].mxu0 %v447
  %v515 = vpop.f32.mrb[0].mxu0
  %v516 = vadd.f32 %v442, %v515
  %v517 = vpop.f32.mrb[0].mxu0
  %v518 = vadd.f32 %v443, %v517
  %519 = vdwg.mxu0
  %v520 = vxor.u32 %v516, 2147483648
  %v521 = vxor.u32 %v518, 2147483648
  %v522 = vmul.f32 %v520, 1.442695
  %v523 = vpow.pop %v522
  %v524 = vmul.f32 %v521, 1.442695
  %v525 = vpow.pop %v524
  %v526 = vadd.f32 %v523, 1.0
  %v527 = vadd.f32 %v525, 1.0
  %v528 = vrcp.pop %v526
  %v529 = vmul.f32 1.0, %v528
  %v530 = vrcp.pop %v527
  %v531 = vmul.f32 1.0, %v530
  %v532 = vtanh.pop %v518
  %v533 = vmul.f32 %v529, %v436
  %v534 = vmul.f32 %v529, %v532
  %536 = vrot.lane.b32.xlu0 %v534, 64
  %v537 = vpop.permute.xlu0 %536
  %v539 = vadd.f32 %v533, %v537
  %v540 = vtanh.pop %v539
  %v541 = vmul.f32 %v531, %v540
  %s542 = smul.u32 3, 2
  %s543 = smul.addr %s542, 8
  %s544 = scalar_lea.vmem [#allocation2], %s543
  %v545 = vld [vmem:[%s544] sm:$0xff]
  %v546 = vld [vmem:[%s544 + $0x8] sm:$0xff]
  %548 = vrot.lane.b32.xlu0 %v541, 64
  %v549 = vpop.permute.xlu0 %548
  %v550 = vsel %vm235, %v549, 0
  %552 = vmatprep.subr.mxu0 %v213
  %553 = vmatpush1.msra.mxu0 %v212
  %554 = vmatprep.subr.mxu0 %v215
  %555 = vmatpush1.msra.mxu0 %v214
  %556 = vmatprep.subr.mxu0 %v217
  %557 = vmatpush1.msra.mxu0 %v216
  %558 = vmatprep.subr.mxu0 %v219
  %559 = vmatpush1.msra.mxu0 %v218
  %560 = vmatprep.subr.mxu0 %v221
  %561 = vmatpush1.msra.mxu0 %v220
  %562 = vmatprep.subr.mxu0 %v223
  %563 = vmatpush1.msra.mxu0 %v222
  %564 = vmatprep.subr.mxu0 %v225
  %565 = vmatpush1.msra.mxu0 %v224
  %566 = vmatprep.subr.mxu0 %v227
  %567 = vmatpush1.msra.mxu0 %v226
  %568 = vmatprep.subr.mxu0 0.0
  %569 = vmatpush1.msra.mxu0 0.0
  %570 = vmatprep.subr.mxu0 0.0
  %571 = vmatpush1.msra.mxu0 0.0
  %572 = vmatprep.subr.mxu0 0.0
  %573 = vmatpush1.msra.mxu0 0.0
  %574 = vmatprep.subr.mxu0 0.0
  %575 = vmatpush1.msra.mxu0 0.0
  %576 = vmatprep.subr.mxu0 0.0
  %577 = vmatpush1.msra.mxu0 0.0
  %578 = vmatprep.subr.mxu0 0.0
  %579 = vmatpush1.msra.mxu0 0.0
  %580 = vmatprep.subr.mxu0 0.0
  %581 = vmatpush1.msra.mxu0 0.0
  %582 = vmatprep.subr.mxu0 0.0
  %583 = vmatpush1.msra.mxu0 0.0
  %584 = vmatprep.subr.mxu0 0.0
  %585 = vmatpush1.msra.mxu0 0.0
  %586 = vmatprep.subr.mxu0 0.0
  %587 = vmatpush1.msra.mxu0 0.0
  %588 = vmatprep.subr.mxu0 0.0
  %589 = vmatpush1.msra.mxu0 0.0
  %590 = vmatprep.subr.mxu0 0.0
  %591 = vmatpush1.msra.mxu0 0.0
  %592 = vmatprep.subr.mxu0 0.0
  %593 = vmatpush1.msra.mxu0 0.0
  %594 = vmatprep.subr.mxu0 0.0
  %595 = vmatpush1.msra.mxu0 0.0
  %596 = vmatprep.subr.mxu0 0.0
  %597 = vmatpush1.msra.mxu0 0.0
  %598 = vmatprep.subr.mxu0 0.0
  %599 = vmatpush1.msra.mxu0 0.0
  %600 = vmatprep.subr.mxu0 0.0
  %601 = vmatpush1.msra.mxu0 0.0
  %602 = vmatprep.subr.mxu0 0.0
  %603 = vmatpush1.msra.mxu0 0.0
  %604 = vmatprep.subr.mxu0 0.0
  %605 = vmatpush1.msra.mxu0 0.0
  %606 = vmatprep.subr.mxu0 0.0
  %607 = vmatpush1.msra.mxu0 0.0
  %608 = vmatprep.subr.mxu0 0.0
  %609 = vmatpush1.msra.mxu0 0.0
  %610 = vmatprep.subr.mxu0 0.0
  %611 = vmatpush1.msra.mxu0 0.0
  %612 = vmatprep.subr.mxu0 0.0
  %613 = vmatpush1.msra.mxu0 0.0
  %614 = vmatprep.subr.mxu0 0.0
  %615 = vmatpush1.msra.mxu0 0.0
  %616 = vmatprep.mubr.f32.mxu0 0.0
  %617 = vmatmul.mubr.f32.gmra.mrb[0].mxu0 %v550
  %v618 = vpop.f32.mrb[0].mxu0
  %v619 = vadd.f32 %v545, %v618
  %v620 = vpop.f32.mrb[0].mxu0
  %v621 = vadd.f32 %v546, %v620
  %622 = vdwg.mxu0
  %v623 = vxor.u32 %v619, 2147483648
  %v624 = vxor.u32 %v621, 2147483648
  %v625 = vmul.f32 %v623, 1.442695
  %v626 = vpow.pop %v625
  %v627 = vmul.f32 %v624, 1.442695
  %v628 = vpow.pop %v627
  %v629 = vadd.f32 %v626, 1.0
  %v630 = vadd.f32 %v628, 1.0
  %v631 = vrcp.pop %v629
  %v632 = vmul.f32 1.0, %v631
  %v633 = vrcp.pop %v630
  %v634 = vmul.f32 1.0, %v633
  %v635 = vtanh.pop %v621
  %v636 = vmul.f32 %v632, %v539
  %v637 = vmul.f32 %v632, %v635
  %639 = vrot.lane.b32.xlu0 %v637, 64
  %v640 = vpop.permute.xlu0 %639
  %v642 = vadd.f32 %v636, %v640
  %v643 = vtanh.pop %v642
  %v644 = vmul.f32 %v634, %v643
  %s645 = smul.u32 4, 2
  %s646 = smul.addr %s645, 8
  %s647 = scalar_lea.vmem [#allocation2], %s646
  %v648 = vld [vmem:[%s647] sm:$0xff]
  %v649 = vld [vmem:[%s647 + $0x8] sm:$0xff]
  %651 = vrot.lane.b32.xlu0 %v644, 64
  %v652 = vpop.permute.xlu0 %651
  %v653 = vsel %vm235, %v652, 0
  %655 = vmatprep.subr.mxu0 %v213
  %656 = vmatpush1.msra.mxu0 %v212
  %657 = vmatprep.subr.mxu0 %v215
  %658 = vmatpush1.msra.mxu0 %v214
  %659 = vmatprep.subr.mxu0 %v217
  %660 = vmatpush1.msra.mxu0 %v216
  %661 = vmatprep.subr.mxu0 %v219
  %662 = vmatpush1.msra.mxu0 %v218
  %663 = vmatprep.subr.mxu0 %v221
  %664 = vmatpush1.msra.mxu0 %v220
  %665 = vmatprep.subr.mxu0 %v223
  %666 = vmatpush1.msra.mxu0 %v222
  %667 = vmatprep.subr.mxu0 %v225
  %668 = vmatpush1.msra.mxu0 %v224
  %669 = vmatprep.subr.mxu0 %v227
  %670 = vmatpush1.msra.mxu0 %v226
  %671 = vmatprep.subr.mxu0 0.0
  %672 = vmatpush1.msra.mxu0 0.0
  %673 = vmatprep.subr.mxu0 0.0
  %674 = vmatpush1.msra.mxu0 0.0
  %675 = vmatprep.subr.mxu0 0.0
  %676 = vmatpush1.msra.mxu0 0.0
  %677 = vmatprep.subr.mxu0 0.0
  %678 = vmatpush1.msra.mxu0 0.0
  %679 = vmatprep.subr.mxu0 0.0
  %680 = vmatpush1.msra.mxu0 0.0
  %681 = vmatprep.subr.mxu0 0.0
  %682 = vmatpush1.msra.mxu0 0.0
  %683 = vmatprep.subr.mxu0 0.0
  %684 = vmatpush1.msra.mxu0 0.0
  %685 = vmatprep.subr.mxu0 0.0
  %686 = vmatpush1.msra.mxu0 0.0
  %687 = vmatprep.subr.mxu0 0.0
  %688 = vmatpush1.msra.mxu0 0.0
  %689 = vmatprep.subr.mxu0 0.0
  %690 = vmatpush1.msra.mxu0 0.0
  %691 = vmatprep.subr.mxu0 0.0
  %692 = vmatpush1.msra.mxu0 0.0
  %693 = vmatprep.subr.mxu0 0.0
  %694 = vmatpush1.msra.mxu0 0.0
  %695 = vmatprep.subr.mxu0 0.0
  %696 = vmatpush1.msra.mxu0 0.0
  %697 = vmatprep.subr.mxu0 0.0
  %698 = vmatpush1.msra.mxu0 0.0
  %699 = vmatprep.subr.mxu0 0.0
  %700 = vmatpush1.msra.mxu0 0.0
  %701 = vmatprep.subr.mxu0 0.0
  %702 = vmatpush1.msra.mxu0 0.0
  %703 = vmatprep.subr.mxu0 0.0
  %704 = vmatpush1.msra.mxu0 0.0
  %705 = vmatprep.subr.mxu0 0.0
  %706 = vmatpush1.msra.mxu0 0.0
  %707 = vmatprep.subr.mxu0 0.0
  %708 = vmatpush1.msra.mxu0 0.0
  %709 = vmatprep.subr.mxu0 0.0
  %710 = vmatpush1.msra.mxu0 0.0
  %711 = vmatprep.subr.mxu0 0.0
  %712 = vmatpush1.msra.mxu0 0.0
  %713 = vmatprep.subr.mxu0 0.0
  %714 = vmatpush1.msra.mxu0 0.0
  %715 = vmatprep.subr.mxu0 0.0
  %716 = vmatpush1.msra.mxu0 0.0
  %717 = vmatprep.subr.mxu0 0.0
  %718 = vmatpush1.msra.mxu0 0.0
  %719 = vmatprep.mubr.f32.mxu0 0.0
  %720 = vmatmul.mubr.f32.gmra.mrb[0].mxu0 %v653
  %v721 = vpop.f32.mrb[0].mxu0
  %v722 = vadd.f32 %v648, %v721
  %v723 = vpop.f32.mrb[0].mxu0
  %v724 = vadd.f32 %v649, %v723
  %725 = vdwg.mxu0
  %v726 = vxor.u32 %v722, 2147483648
  %v727 = vxor.u32 %v724, 2147483648
  %v728 = vmul.f32 %v726, 1.442695
  %v729 = vpow.pop %v728
  %v730 = vmul.f32 %v727, 1.442695
  %v731 = vpow.pop %v730
  %v732 = vadd.f32 %v729, 1.0
  %v733 = vadd.f32 %v731, 1.0
  %v734 = vrcp.pop %v732
  %v735 = vmul.f32 1.0, %v734
  %v736 = vrcp.pop %v733
  %v737 = vmul.f32 1.0, %v736
  %v738 = vtanh.pop %v724
  %v739 = vmul.f32 %v735, %v642
  %v740 = vmul.f32 %v735, %v738
  %742 = vrot.lane.b32.xlu0 %v740, 64
  %v743 = vpop.permute.xlu0 %742
  %v745 = vadd.f32 %v739, %v743
  %v746 = vtanh.pop %v745
  %v747 = vmul.f32 %v737, %v746
  %s748 = smul.u32 5, 2
  %s749 = smul.addr %s748, 8
  %s750 = scalar_lea.vmem [#allocation2], %s749
  %v751 = vld [vmem:[%s750] sm:$0xff]
  %v752 = vld [vmem:[%s750 + $0x8] sm:$0xff]
  %754 = vrot.lane.b32.xlu0 %v747, 64
  %v755 = vpop.permute.xlu0 %754
  %v756 = vsel %vm235, %v755, 0
  %758 = vmatprep.subr.mxu0 %v213
  %759 = vmatpush1.msra.mxu0 %v212
  %760 = vmatprep.subr.mxu0 %v215
  %761 = vmatpush1.msra.mxu0 %v214
  %762 = vmatprep.subr.mxu0 %v217
  %763 = vmatpush1.msra.mxu0 %v216
  %764 = vmatprep.subr.mxu0 %v219
  %765 = vmatpush1.msra.mxu0 %v218
  %766 = vmatprep.subr.mxu0 %v221
  %767 = vmatpush1.msra.mxu0 %v220
  %768 = vmatprep.subr.mxu0 %v223
  %769 = vmatpush1.msra.mxu0 %v222
  %770 = vmatprep.subr.mxu0 %v225
  %771 = vmatpush1.msra.mxu0 %v224
  %772 = vmatprep.subr.mxu0 %v227
  %773 = vmatpush1.msra.mxu0 %v226
  %774 = vmatprep.subr.mxu0 0.0
  %775 = vmatpush1.msra.mxu0 0.0
  %776 = vmatprep.subr.mxu0 0.0
  %777 = vmatpush1.msra.mxu0 0.0
  %778 = vmatprep.subr.mxu0 0.0
  %779 = vmatpush1.msra.mxu0 0.0
  %780 = vmatprep.subr.mxu0 0.0
  %781 = vmatpush1.msra.mxu0 0.0
  %782 = vmatprep.subr.mxu0 0.0
  %783 = vmatpush1.msra.mxu0 0.0
  %784 = vmatprep.subr.mxu0 0.0
  %785 = vmatpush1.msra.mxu0 0.0
  %786 = vmatprep.subr.mxu0 0.0
  %787 = vmatpush1.msra.mxu0 0.0
  %788 = vmatprep.subr.mxu0 0.0
  %789 = vmatpush1.msra.mxu0 0.0
  %790 = vmatprep.subr.mxu0 0.0
  %791 = vmatpush1.msra.mxu0 0.0
  %792 = vmatprep.subr.mxu0 0.0
  %793 = vmatpush1.msra.mxu0 0.0
  %794 = vmatprep.subr.mxu0 0.0
  %795 = vmatpush1.msra.mxu0 0.0
  %796 = vmatprep.subr.mxu0 0.0
  %797 = vmatpush1.msra.mxu0 0.0
  %798 = vmatprep.subr.mxu0 0.0
  %799 = vmatpush1.msra.mxu0 0.0
  %800 = vmatprep.subr.mxu0 0.0
  %801 = vmatpush1.msra.mxu0 0.0
  %802 = vmatprep.subr.mxu0 0.0
  %803 = vmatpush1.msra.mxu0 0.0
  %804 = vmatprep.subr.mxu0 0.0
  %805 = vmatpush1.msra.mxu0 0.0
  %806 = vmatprep.subr.mxu0 0.0
  %807 = vmatpush1.msra.mxu0 0.0
  %808 = vmatprep.subr.mxu0 0.0
  %809 = vmatpush1.msra.mxu0 0.0
  %810 = vmatprep.subr.mxu0 0.0
  %811 = vmatpush1.msra.mxu0 0.0
  %812 = vmatprep.subr.mxu0 0.0
  %813 = vmatpush1.msra.mxu0 0.0
  %814 = vmatprep.subr.mxu0 0.0
  %815 = vmatpush1.msra.mxu0 0.0
  %816 = vmatprep.subr.mxu0 0.0
  %817 = vmatpush1.msra.mxu0 0.0
  %818 = vmatprep.subr.mxu0 0.0
  %819 = vmatpush1.msra.mxu0 0.0
  %820 = vmatprep.subr.mxu0 0.0
  %821 = vmatpush1.msra.mxu0 0.0
  %822 = vmatprep.mubr.f32.mxu0 0.0
  %823 = vmatmul.mubr.f32.gmra.mrb[0].mxu0 %v756
  %v824 = vpop.f32.mrb[0].mxu0
  %v825 = vadd.f32 %v751, %v824
  %v826 = vpop.f32.mrb[0].mxu0
  %v827 = vadd.f32 %v752, %v826
  %828 = vdwg.mxu0
  %v829 = vxor.u32 %v825, 2147483648
  %v830 = vxor.u32 %v827, 2147483648
  %v831 = vmul.f32 %v829, 1.442695
  %v832 = vpow.pop %v831
  %v833 = vmul.f32 %v830, 1.442695
  %v834 = vpow.pop %v833
  %v835 = vadd.f32 %v832, 1.0
  %v836 = vadd.f32 %v834, 1.0
  %v837 = vrcp.pop %v835
  %v838 = vmul.f32 1.0, %v837
  %v839 = vrcp.pop %v836
  %v840 = vmul.f32 1.0, %v839
  %v841 = vtanh.pop %v827
  %v842 = vmul.f32 %v838, %v745
  %v843 = vmul.f32 %v838, %v841
  %845 = vrot.lane.b32.xlu0 %v843, 64
  %v846 = vpop.permute.xlu0 %845
  %v848 = vadd.f32 %v842, %v846
  %v849 = vtanh.pop %v848
  %v850 = vmul.f32 %v840, %v849
  %s851 = smul.u32 6, 2
  %s852 = smul.addr %s851, 8
  %s853 = scalar_lea.vmem [#allocation2], %s852
  %v854 = vld [vmem:[%s853] sm:$0xff]
  %v855 = vld [vmem:[%s853 + $0x8] sm:$0xff]
  %857 = vrot.lane.b32.xlu0 %v850, 64
  %v858 = vpop.permute.xlu0 %857
  %v859 = vsel %vm235, %v858, 0
  %861 = vmatprep.subr.mxu0 %v213
  %862 = vmatpush1.msra.mxu0 %v212
  %863 = vmatprep.subr.mxu0 %v215
  %864 = vmatpush1.msra.mxu0 %v214
  %865 = vmatprep.subr.mxu0 %v217
  %866 = vmatpush1.msra.mxu0 %v216
  %867 = vmatprep.subr.mxu0 %v219
  %868 = vmatpush1.msra.mxu0 %v218
  %869 = vmatprep.subr.mxu0 %v221
  %870 = vmatpush1.msra.mxu0 %v220
  %871 = vmatprep.subr.mxu0 %v223
  %872 = vmatpush1.msra.mxu0 %v222
  %873 = vmatprep.subr.mxu0 %v225
  %874 = vmatpush1.msra.mxu0 %v224
  %875 = vmatprep.subr.mxu0 %v227
  %876 = vmatpush1.msra.mxu0 %v226
  %877 = vmatprep.subr.mxu0 0.0
  %878 = vmatpush1.msra.mxu0 0.0
  %879 = vmatprep.subr.mxu0 0.0
  %880 = vmatpush1.msra.mxu0 0.0
  %881 = vmatprep.subr.mxu0 0.0
  %882 = vmatpush1.msra.mxu0 0.0
  %883 = vmatprep.subr.mxu0 0.0
  %884 = vmatpush1.msra.mxu0 0.0
  %885 = vmatprep.subr.mxu0 0.0
  %886 = vmatpush1.msra.mxu0 0.0
  %887 = vmatprep.subr.mxu0 0.0
  %888 = vmatpush1.msra.mxu0 0.0
  %889 = vmatprep.subr.mxu0 0.0
  %890 = vmatpush1.msra.mxu0 0.0
  %891 = vmatprep.subr.mxu0 0.0
  %892 = vmatpush1.msra.mxu0 0.0
  %893 = vmatprep.subr.mxu0 0.0
  %894 = vmatpush1.msra.mxu0 0.0
  %895 = vmatprep.subr.mxu0 0.0
  %896 = vmatpush1.msra.mxu0 0.0
  %897 = vmatprep.subr.mxu0 0.0
  %898 = vmatpush1.msra.mxu0 0.0
  %899 = vmatprep.subr.mxu0 0.0
  %900 = vmatpush1.msra.mxu0 0.0
  %901 = vmatprep.subr.mxu0 0.0
  %902 = vmatpush1.msra.mxu0 0.0
  %903 = vmatprep.subr.mxu0 0.0
  %904 = vmatpush1.msra.mxu0 0.0
  %905 = vmatprep.subr.mxu0 0.0
  %906 = vmatpush1.msra.mxu0 0.0
  %907 = vmatprep.subr.mxu0 0.0
  %908 = vmatpush1.msra.mxu0 0.0
  %909 = vmatprep.subr.mxu0 0.0
  %910 = vmatpush1.msra.mxu0 0.0
  %911 = vmatprep.subr.mxu0 0.0
  %912 = vmatpush1.msra.mxu0 0.0
  %913 = vmatprep.subr.mxu0 0.0
  %914 = vmatpush1.msra.mxu0 0.0
  %915 = vmatprep.subr.mxu0 0.0
  %916 = vmatpush1.msra.mxu0 0.0
  %917 = vmatprep.subr.mxu0 0.0
  %918 = vmatpush1.msra.mxu0 0.0
  %919 = vmatprep.subr.mxu0 0.0
  %920 = vmatpush1.msra.mxu0 0.0
  %921 = vmatprep.subr.mxu0 0.0
  %922 = vmatpush1.msra.mxu0 0.0
  %923 = vmatprep.subr.mxu0 0.0
  %924 = vmatpush1.msra.mxu0 0.0
  %925 = vmatprep.mubr.f32.mxu0 0.0
  %926 = vmatmul.mubr.f32.gmra.mrb[0].mxu0 %v859
  %v927 = vpop.f32.mrb[0].mxu0
  %v928 = vadd.f32 %v854, %v927
  %v929 = vpop.f32.mrb[0].mxu0
  %v930 = vadd.f32 %v855, %v929
  %931 = vdwg.mxu0
  %v932 = vxor.u32 %v928, 2147483648
  %v933 = vxor.u32 %v930, 2147483648
  %v934 = vmul.f32 %v932, 1.442695
  %v935 = vpow.pop %v934
  %v936 = vmul.f32 %v933, 1.442695
  %v937 = vpow.pop %v936
  %v938 = vadd.f32 %v935, 1.0
  %v939 = vadd.f32 %v937, 1.0
  %v940 = vrcp.pop %v938
  %v941 = vmul.f32 1.0, %v940
  %v942 = vrcp.pop %v939
  %v943 = vmul.f32 1.0, %v942
  %v944 = vtanh.pop %v930
  %v945 = vmul.f32 %v941, %v848
  %v946 = vmul.f32 %v941, %v944
  %948 = vrot.lane.b32.xlu0 %v946, 64
  %v949 = vpop.permute.xlu0 %948
  %v951 = vadd.f32 %v945, %v949
  %v952 = vtanh.pop %v951
  %v953 = vmul.f32 %v943, %v952
  %s954 = smul.u32 7, 2
  %s955 = smul.addr %s954, 8
  %s956 = scalar_lea.vmem [#allocation2], %s955
  %v957 = vld [vmem:[%s956] sm:$0xff]
  %v958 = vld [vmem:[%s956 + $0x8] sm:$0xff]
  %960 = vrot.lane.b32.xlu0 %v953, 64
  %v961 = vpop.permute.xlu0 %960
  %v962 = vsel %vm235, %v961, 0
  %964 = vmatprep.subr.mxu0 %v213
  %965 = vmatpush1.msra.mxu0 %v212
  %966 = vmatprep.subr.mxu0 %v215
  %967 = vmatpush1.msra.mxu0 %v214
  %968 = vmatprep.subr.mxu0 %v217
  %969 = vmatpush1.msra.mxu0 %v216
  %970 = vmatprep.subr.mxu0 %v219
  %971 = vmatpush1.msra.mxu0 %v218
  %972 = vmatprep.subr.mxu0 %v221
  %973 = vmatpush1.msra.mxu0 %v220
  %974 = vmatprep.subr.mxu0 %v223
  %975 = vmatpush1.msra.mxu0 %v222
  %976 = vmatprep.subr.mxu0 %v225
  %977 = vmatpush1.msra.mxu0 %v224
  %978 = vmatprep.subr.mxu0 %v227
  %979 = vmatpush1.msra.mxu0 %v226
  %980 = vmatprep.subr.mxu0 0.0
  %981 = vmatpush1.msra.mxu0 0.0
  %982 = vmatprep.subr.mxu0 0.0
  %983 = vmatpush1.msra.mxu0 0.0
  %984 = vmatprep.subr.mxu0 0.0
  %985 = vmatpush1.msra.mxu0 0.0
  %986 = vmatprep.subr.mxu0 0.0
  %987 = vmatpush1.msra.mxu0 0.0
  %988 = vmatprep.subr.mxu0 0.0
  %989 = vmatpush1.msra.mxu0 0.0
  %990 = vmatprep.subr.mxu0 0.0
  %991 = vmatpush1.msra.mxu0 0.0
  %992 = vmatprep.subr.mxu0 0.0
  %993 = vmatpush1.msra.mxu0 0.0
  %994 = vmatprep.subr.mxu0 0.0
  %995 = vmatpush1.msra.mxu0 0.0
  %996 = vmatprep.subr.mxu0 0.0
  %997 = vmatpush1.msra.mxu0 0.0
  %998 = vmatprep.subr.mxu0 0.0
  %999 = vmatpush1.msra.mxu0 0.0
  %1000 = vmatprep.subr.mxu0 0.0
  %1001 = vmatpush1.msra.mxu0 0.0
  %1002 = vmatprep.subr.mxu0 0.0
  %1003 = vmatpush1.msra.mxu0 0.0
  %1004 = vmatprep.subr.mxu0 0.0
  %1005 = vmatpush1.msra.mxu0 0.0
  %1006 = vmatprep.subr.mxu0 0.0
  %1007 = vmatpush1.msra.mxu0 0.0
  %1008 = vmatprep.subr.mxu0 0.0
  %1009 = vmatpush1.msra.mxu0 0.0
  %1010 = vmatprep.subr.mxu0 0.0
  %1011 = vmatpush1.msra.mxu0 0.0
  %1012 = vmatprep.subr.mxu0 0.0
  %1013 = vmatpush1.msra.mxu0 0.0
  %1014 = vmatprep.subr.mxu0 0.0
  %1015 = vmatpush1.msra.mxu0 0.0
  %1016 = vmatprep.subr.mxu0 0.0
  %1017 = vmatpush1.msra.mxu0 0.0
  %1018 = vmatprep.subr.mxu0 0.0
  %1019 = vmatpush1.msra.mxu0 0.0
  %1020 = vmatprep.subr.mxu0 0.0
  %1021 = vmatpush1.msra.mxu0 0.0
  %1022 = vmatprep.subr.mxu0 0.0
  %1023 = vmatpush1.msra.mxu0 0.0
  %1024 = vmatprep.subr.mxu0 0.0
  %1025 = vmatpush1.msra.mxu0 0.0
  %1026 = vmatprep.subr.mxu0 0.0
  %1027 = vmatpush1.msra.mxu0 0.0
  %1028 = vmatprep.mubr.f32.mxu0 0.0
  %1029 = vmatmul.mubr.f32.gmra.mrb[0].mxu0 %v962
  %v1030 = vpop.f32.mrb[0].mxu0
  %v1031 = vadd.f32 %v957, %v1030
  %v1032 = vpop.f32.mrb[0].mxu0
  %v1033 = vadd.f32 %v958, %v1032
  %1034 = vdwg.mxu0
  %v1035 = vxor.u32 %v1031, 2147483648
  %v1036 = vxor.u32 %v1033, 2147483648
  %v1037 = vmul.f32 %v1035, 1.442695
  %v1038 = vpow.pop %v1037
  %v1039 = vmul.f32 %v1036, 1.442695
  %v1040 = vpow.pop %v1039
  %v1041 = vadd.f32 %v1038, 1.0
  %v1042 = vadd.f32 %v1040, 1.0
  %v1043 = vrcp.pop %v1041
  %v1044 = vmul.f32 1.0, %v1043
  %v1045 = vrcp.pop %v1042
  %v1046 = vmul.f32 1.0, %v1045
  %v1047 = vtanh.pop %v1033
  %v1048 = vmul.f32 %v1044, %v951
  %v1049 = vmul.f32 %v1044, %v1047
  %1051 = vrot.lane.b32.xlu0 %v1049, 64
  %v1052 = vpop.permute.xlu0 %1051
  %v1054 = vadd.f32 %v1048, %v1052
  %v1055 = vtanh.pop %v1054
  %v1056 = vmul.f32 %v1046, %v1055
  %1058 = vrot.lane.b32.xlu0 %v1056, 64
  %v1059 = vpop.permute.xlu0 %1058
  %1061 = vst.msk [vmem:[#allocation3] sm:$0xff] %vm235, %v1059
  %1063 = vrot.lane.b32.xlu0 %v1054, 64
  %v1064 = vpop.permute.xlu0 %1063
  %1066 = vst.msk [vmem:[#allocation4] sm:$0xff] %vm235, %v1064
  // Predicated region
  $region22: #{_cross_encoder_forward_impl.1} parent=0 // pred_check
    %p1067 = pneg %p199
  $region23: #{_cross_encoder_forward_impl.1} parent=0 // pred_check_branch
    %1069 = sbr.rel (%p1067) target = $region25
  $region24: #{_cross_encoder_forward_impl.1} parent=0 // pred_region
    %v1070 = vld [vmem:[%s3] sm:$0x3]
    %v1072 = vlaneseq
    %v1073 = vshrl.u32 %v1072, 7
    %v1074 = vsub.s32 0, %v1073
    %v1075 = vrot.slane %v1070, %v1074
    %v1076 = vlaneseq
    %v1077 = vshrl.u32 %v1076, 7
    %v1078 = vsub.s32 1, %v1077
    %v1079 = vrot.slane %v1070, %v1078
    %v1082 = vsel %vm235, %v1059, 0
    %1084 = vmatprep.subr.mxu0 %v213
    %1085 = vmatpush1.msra.mxu0 %v212
    %1086 = vmatprep.subr.mxu0 %v215
    %1087 = vmatpush1.msra.mxu0 %v214
    %1088 = vmatprep.subr.mxu0 %v217
    %1089 = vmatpush1.msra.mxu0 %v216
    %1090 = vmatprep.subr.mxu0 %v219
    %1091 = vmatpush1.msra.mxu0 %v218
    %1092 = vmatprep.subr.mxu0 %v221
    %1093 = vmatpush1.msra.mxu0 %v220
    %1094 = vmatprep.subr.mxu0 %v223
    %1095 = vmatpush1.msra.mxu0 %v222
    %1096 = vmatprep.subr.mxu0 %v225
    %1097 = vmatpush1.msra.mxu0 %v224
    %1098 = vmatprep.subr.mxu0 %v227
    %1099 = vmatpush1.msra.mxu0 %v226
    %1100 = vmatprep.subr.mxu0 0.0
    %1101 = vmatpush1.msra.mxu0 0.0
    %1102 = vmatprep.subr.mxu0 0.0
    %1103 = vmatpush1.msra.mxu0 0.0
    %1104 = vmatprep.subr.mxu0 0.0
    %1105 = vmatpush1.msra.mxu0 0.0
    %1106 = vmatprep.subr.mxu0 0.0
    %1107 = vmatpush1.msra.mxu0 0.0
    %1108 = vmatprep.subr.mxu0 0.0
    %1109 = vmatpush1.msra.mxu0 0.0
    %1110 = vmatprep.subr.mxu0 0.0
    %1111 = vmatpush1.msra.mxu0 0.0
    %1112 = vmatprep.subr.mxu0 0.0
    %1113 = vmatpush1.msra.mxu0 0.0
    %1114 = vmatprep.subr.mxu0 0.0
    %1115 = vmatpush1.msra.mxu0 0.0
    %1116 = vmatprep.subr.mxu0 0.0
    %1117 = vmatpush1.msra.mxu0 0.0
    %1118 = vmatprep.subr.mxu0 0.0
    %1119 = vmatpush1.msra.mxu0 0.0
    %1120 = vmatprep.subr.mxu0 0.0
    %1121 = vmatpush1.msra.mxu0 0.0
    %1122 = vmatprep.subr.mxu0 0.0
    %1123 = vmatpush1.msra.mxu0 0.0
    %1124 = vmatprep.subr.mxu0 0.0
    %1125 = vmatpush1.msra.mxu0 0.0
    %1126 = vmatprep.subr.mxu0 0.0
    %1127 = vmatpush1.msra.mxu0 0.0
    %1128 = vmatprep.subr.mxu0 0.0
    %1129 = vmatpush1.msra.mxu0 0.0
    %1130 = vmatprep.subr.mxu0 0.0
    %1131 = vmatpush1.msra.mxu0 0.0
    %1132 = vmatprep.subr.mxu0 0.0
    %1133 = vmatpush1.msra.mxu0 0.0
    %1134 = vmatprep.subr.mxu0 0.0
    %1135 = vmatpush1.msra.mxu0 0.0
    %1136 = vmatprep.subr.mxu0 0.0
    %1137 = vmatpush1.msra.mxu0 0.0
    %1138 = vmatprep.subr.mxu0 0.0
    %1139 = vmatpush1.msra.mxu0 0.0
    %1140 = vmatprep.subr.mxu0 0.0
    %1141 = vmatpush1.msra.mxu0 0.0
    %1142 = vmatprep.subr.mxu0 0.0
    %1143 = vmatpush1.msra.mxu0 0.0
    %1144 = vmatprep.subr.mxu0 0.0
    %1145 = vmatpush1.msra.mxu0 0.0
    %1146 = vmatprep.subr.mxu0 0.0
    %1147 = vmatpush1.msra.mxu0 0.0
    %1148 = vmatprep.mubr.f32.mxu0 0.0
    %1149 = vmatmul.mubr.f32.gmra.mrb[0].mxu0 %v1082
    %v1150 = vpop.f32.mrb[0].mxu0
    %v1151 = vadd.f32 %v1075, %v1150
    %v1152 = vpop.f32.mrb[0].mxu0
    %v1153 = vadd.f32 %v1079, %v1152
    %1154 = vdwg.mxu0
    %v1155 = vxor.u32 %v1151, 2147483648
    %v1156 = vxor.u32 %v1153, 2147483648
    %v1157 = vmul.f32 %v1155, 1.442695
    %v1158 = vpow.pop %v1157
    %v1159 = vmul.f32 %v1156, 1.442695
    %v1160 = vpow.pop %v1159
    %v1161 = vadd.f32 %v1158, 1.0
    %v1162 = vadd.f32 %v1160, 1.0
    %v1163 = vrcp.pop %v1161
    %v1164 = vmul.f32 1.0, %v1163
    %v1165 = vrcp.pop %v1162
    %v1166 = vmul.f32 1.0, %v1165
    %v1167 = vtanh.pop %v1153
    %v1168 = vmul.f32 %v1164, %v1054
    %v1169 = vmul.f32 %v1164, %v1167
    %1171 = vrot.lane.b32.xlu0 %v1169, 64
    %v1172 = vpop.permute.xlu0 %1171
    %v1174 = vadd.f32 %v1168, %v1172
    %v1175 = vtanh.pop %v1174
    %v1176 = vmul.f32 %v1166, %v1175
    %1178 = vrot.lane.b32.xlu0 %v1176, 32
    %v1179 = vpop.permute.xlu0 %1178
    %vm1181 = vcmask 261120
    %1182 = vst.msk [vmem:[%s4] sm:$0xff] %vm1181, %v1179
  $region25: #{_cross_encoder_forward_impl.1} parent=0 // pred_fallthru
    _
  // Predicated region
  $region26: #{_cross_encoder_forward_impl.1} parent=0 // pred_check
    _
  $region27: #{_cross_encoder_forward_impl.1} parent=0 // pred_check_branch
    %1184 = sbr.rel (0) target = $region29
  $region28: #{_cross_encoder_forward_impl.1} parent=0 // pred_region
    _
  $region29: #{_cross_encoder_forward_impl.1} parent=0 // pred_fallthru
    _
  // Predicated region
  $region30: #{_cross_encoder_forward_impl.1} parent=0 // pred_check
    _
  $region31: #{_cross_encoder_forward_impl.1} parent=0 // pred_check_branch
    %1186 = sbr.rel (0) target = $region33
  $region32: #{_cross_encoder_forward_impl.1} parent=0 // pred_region
    _
  $region33: #{_cross_encoder_forward_impl.1} parent=0 // pred_fallthru
    _

</llo_original>
